<compile_context>
chip_gen: v7x
topology: tpu7x:2x2x1
jax: 0.10.0
libtpu: 0.0.40
codegen_flags: <defaults>
</compile_context>

<pallas_src>
import functools

import jax
import jax.numpy as jnp
from jax import lax
from jax.experimental import pallas as pl
from jax.experimental.pallas import tpu as pltpu


def _mha_kernel(x_ref, y_ref, wq_ref, bq_ref, wkv_ref, bkv_ref, wp_ref, bp_ref,
                out_ref, attn_ref, *, num_heads: int, scale: float,
                compute_dtype):
    """Fused multi-head attention for one (batch, query-tile) grid step.

    x_ref: (1, tq, c), y_ref: (1, m, d)
    wq: (c, c), bq: (1, c); wkv: (d, 2c), bkv: (1, 2c); wp: (c, c), bp: (1, c)
    out_ref: (1, tq, c); attn_ref: (1, h, tq, m)
    """
    _, tq, c = x_ref.shape
    _, m, _ = y_ref.shape
    hd = c // num_heads
    cdt = compute_dtype

    # ---- Q and fused K/V projections: bf16 MXU matmuls, f32 accumulation.
    x = x_ref[0].astype(cdt)                                           # (tq, c)
    y = y_ref[0].astype(cdt)                                           # (m, d)
    q = jnp.dot(x, wq_ref[...].astype(cdt),
                preferred_element_type=jnp.float32) + bq_ref[...]      # (tq, c)  f32
    kv = jnp.dot(y, wkv_ref[...].astype(cdt),
                 preferred_element_type=jnp.float32) + bkv_ref[...]    # (m, 2c)  f32
    k = kv[:, :c]                                  # (m, c)  matches torch reshape(b,m,2,h,hd) order
    v = kv[:, c:]                                  # (m, c)

    # ---- Head-major 3-D views (one relayout each; replaces the old unrolled
    # per-head loop, head_dim-wide lane slices and the final concatenate).
    qh = jnp.transpose(q.reshape(tq, num_heads, hd), (1, 0, 2)).astype(cdt)  # (h, tq, hd)
    kh = jnp.transpose(k.reshape(m, num_heads, hd), (1, 0, 2)).astype(cdt)   # (h, m, hd)
    vh = jnp.transpose(v.reshape(m, num_heads, hd), (1, 0, 2)).astype(cdt)   # (h, m, hd)

    # ---- Scores for all heads in a single batched dot_general.
    s = lax.dot_general(qh, kh, (((2,), (2,)), ((0,), (0,))),
                        preferred_element_type=jnp.float32) * scale          # (h, tq, m) f32

    # ---- Numerically stable softmax; divide replaced by EUP reciprocal.
    s = s - jnp.max(s, axis=-1, keepdims=True)
    e = jnp.exp(s)
    p = e * pl.reciprocal(jnp.sum(e, axis=-1, keepdims=True), approx=True)   # (h, tq, m)
    attn_ref[0] = p.astype(attn_ref.dtype)         # single contiguous (h, tq, m) store

    # ---- attention @ V for all heads in one batched dot_general.
    o = lax.dot_general(p.astype(cdt), vh, (((2,), (1,)), ((0,), (0,))),
                        preferred_element_type=jnp.float32)                  # (h, tq, hd)
    o = jnp.transpose(o, (1, 0, 2)).reshape(tq, c)                           # (tq, c) == torch reshape(b,n,c)

    # ---- Output projection.
    out = jnp.dot(o.astype(cdt), wp_ref[...].astype(cdt),
                  preferred_element_type=jnp.float32) + bp_ref[...]
    out_ref[0] = out.astype(out_ref.dtype)


def _pick_query_tile(n: int, target: int = 256) -> int:
    """Largest divisor of n that is <= target and sublane-aligned (else n)."""
    if n <= target:
        return n
    for t in range(target, 7, -1):
        if n % t == 0 and t % 8 == 0:
            return t
    return n


def multi_head_attention_pallas(x, y, wq, bq, wkv, bkv, wp, bp, num_heads, *,
                                compute_dtype=jnp.bfloat16):
    """x: (b, n, c), y: (b, m, d) -> (out (b, n, c), attention (b, n, m, h))."""
    b, n, c = x.shape
    _, m, d = y.shape
    assert c % num_heads == 0
    head_dim = c // num_heads
    scale = head_dim ** (-0.5)

    tq = _pick_query_tile(n)
    n_qt = n // tq
    grid = (b, n_qt)

    # Advisory cost hint for XLA's scheduler.
    flops = b * (2 * n * c * c                 # Q projection
                 + n_qt * 2 * m * d * (2 * c)  # fused K/V projection (per q-tile)
                 + 2 * n * m * c               # Q @ K^T  (all heads)
                 + 2 * n * m * c               # attn @ V (all heads)
                 + 2 * n * c * c)              # output projection
    isz = jnp.dtype(x.dtype).itemsize
    wsz = jnp.dtype(wq.dtype).itemsize
    bytes_accessed = int(
        (x.size + y.size * n_qt + b * n * c + b * num_heads * n * m) * isz
        + (wq.size + bq.size + wkv.size + bkv.size + wp.size + bp.size) * wsz)
    cost = pl.CostEstimate(flops=flops, transcendentals=b * num_heads * n * m,
                           bytes_accessed=bytes_accessed)

    # VMEM budget: weights + double-buffered activation/output tiles + rough
    # in-kernel temporaries; capped at 64 MiB (valid on v7x's smaller VMEM).
    f32sz = 4
    weight_bytes = (2 * c * c + 2 * c * d + 4 * c) * f32sz
    tile_bytes = (tq * c + m * d + tq * c + num_heads * tq * m) * f32sz
    scratch_bytes = (3 * tq * c + 2 * m * c
                     + 4 * num_heads * tq * m + 3 * num_heads * tq * head_dim) * f32sz
    est = 2 * (weight_bytes + tile_bytes) + scratch_bytes
    vmem_limit = int(min(max(2 * est, 32 * 1024 * 1024), 64 * 1024 * 1024))

    # TODO(synk): weight BlockSpecs could be single-buffered (pipeline_mode)
    # to reclaim VMEM on v7x at large c/d; left default-buffered here.
    out, attn_hnm = pl.pallas_call(
        functools.partial(_mha_kernel, num_heads=num_heads, scale=scale,
                          compute_dtype=compute_dtype),
        out_shape=(
            jax.ShapeDtypeStruct((b, n, c), x.dtype),
            jax.ShapeDtypeStruct((b, num_heads, n, m), x.dtype),
        ),
        grid=grid,
        in_specs=[
            pl.BlockSpec((1, tq, c), lambda i, j: (i, j, 0)),       # x (per batch, per q-tile)
            pl.BlockSpec((1, m, d), lambda i, j: (i, 0, 0)),        # y (full K/V per batch)
            pl.BlockSpec((c, c), lambda i, j: (0, 0)),              # wq (VMEM-resident)
            pl.BlockSpec((1, c), lambda i, j: (0, 0)),              # bq
            pl.BlockSpec((d, 2 * c), lambda i, j: (0, 0)),          # wkv
            pl.BlockSpec((1, 2 * c), lambda i, j: (0, 0)),          # bkv
            pl.BlockSpec((c, c), lambda i, j: (0, 0)),              # wp
            pl.BlockSpec((1, c), lambda i, j: (0, 0)),              # bp
        ],
        out_specs=(
            pl.BlockSpec((1, tq, c), lambda i, j: (i, j, 0)),
            pl.BlockSpec((1, num_heads, tq, m), lambda i, j: (i, 0, j, 0)),
        ),
        compiler_params=pltpu.CompilerParams(
            dimension_semantics=("parallel", "parallel"),
            vmem_limit_bytes=vmem_limit),
        cost_estimate=cost,
    )(x, y, wq, bq, wkv, bkv, wp, bp)

    # Module-compatible (b, n, m, h) layout. Consumers that accept (b, h, n, m)
    # should use attn_hnm directly and skip this transpose.
    attention = jnp.transpose(attn_hnm, (0, 2, 3, 1))
    return out, attention


class MultiHeadAttention:
    """JAX/Pallas mirror of the PyTorch MultiHeadAttention module."""

    def __init__(self, dim_self, dim_ref, num_heads, bias=True, dropout=0.0, *,
                 key, dtype=jnp.float32):
        self.num_heads = num_heads
        head_dim = dim_self // num_heads
        self.scale = head_dim ** (-0.5)
        kq, kkv, kp, kbq, kbkv, kbp = jax.random.split(key, 6)
        s = 0.1
        wq = s * jax.random.normal(kq, (dim_self, dim_self), dtype=dtype)
        wkv = s * jax.random.normal(kkv, (dim_ref, 2 * dim_self), dtype=dtype)
        wp = s * jax.random.normal(kp, (dim_self, dim_self), dtype=dtype)
        if bias:
            bq = s * jax.random.normal(kbq, (1, dim_self), dtype=dtype)
            bkv = s * jax.random.normal(kbkv, (1, 2 * dim_self), dtype=dtype)
        else:
            bq = jnp.zeros((1, dim_self), dtype=dtype)
            bkv = jnp.zeros((1, 2 * dim_self), dtype=dtype)
        bp = s * jax.random.normal(kbp, (1, dim_self), dtype=dtype)  # project always has bias
        self.params = (wq, bq, wkv, bkv, wp, bp)
        # Note: the torch module defines nn.Dropout but never applies it in
        # forward(), so there is nothing to translate for dropout.

    def __call__(self, x, y=None, mask=None):
        # TODO(synk): attention mask (masked_fill with -inf) not implemented;
        # the default forward path (mask=None) is fully supported.
        assert mask is None, "mask not supported in the Pallas kernel"
        y = y if y is not None else x
        wq, bq, wkv, bkv, wp, bp = self.params
        return multi_head_attention_pallas(x, y, wq, bq, wkv, bkv, wp, bp,
                                           self.num_heads)


def mha_reference(x, y, params, num_heads, scale):
    """Pure-JAX f32 reference mirroring the PyTorch forward exactly."""
    wq, bq, wkv, bkv, wp, bp = params
    b, n, c = x.shape
    _, m, d = y.shape
    hd = c // num_heads
    prec = lax.Precision.HIGHEST
    q = (jnp.matmul(x, wq, precision=prec) + bq).reshape(b, n, num_heads, hd)
    kv = (jnp.matmul(y, wkv, precision=prec) + bkv).reshape(b, m, 2, num_heads, hd)
    k, v = kv[:, :, 0], kv[:, :, 1]
    att = jnp.einsum('bnhd,bmhd->bnmh', q, k, precision=prec) * scale
    att = jax.nn.softmax(att, axis=2)
    out = jnp.einsum('bnmh,bmhd->bnhd', att, v, precision=prec).reshape(b, n, c)
    out = jnp.matmul(out, wp, precision=prec) + bp
    return out, att


if __name__ == "__main__":
    key = jax.random.PRNGKey(0)
    key, xk, mk = jax.random.split(key, 3)

    # Small shapes consistent with the module: b=2, seq n=m=8, dim_self=32,
    # dim_ref=32, num_heads=4 (head_dim=8).
    batch, seq, dim_self, dim_ref, num_heads = 2, 8, 32, 32, 4
    x = jax.random.normal(xk, (batch, seq, dim_self), dtype=jnp.float32)

    mha = MultiHeadAttention(dim_self, dim_ref, num_heads, key=mk)
    out, attn = mha(x)                       # self-attention (y=None), no mask
    out = jax.block_until_ready(out)
    attn = jax.block_until_ready(attn)

    ref_out, ref_attn = mha_reference(x, x, mha.params, num_heads, mha.scale)
    assert out.shape == (batch, seq, dim_self)
    assert attn.shape == (batch, seq, seq, num_heads)
    # bf16 matmul inputs with f32 accumulation (+ approx reciprocal) vs an
    # f32-HIGHEST reference: use bf16-appropriate tolerances.
    assert jnp.allclose(out, ref_out, atol=2e-2, rtol=2e-2), \
        float(jnp.max(jnp.abs(out - ref_out)))
    assert jnp.allclose(attn, ref_attn, atol=2e-2, rtol=2e-2), \
        float(jnp.max(jnp.abs(attn - ref_attn)))

    print("KERNEL_OK")
</pallas_src>

<mosaic_0001>
module attributes {stable_mosaic.version = 11 : i64} {
  func.func @_mha_kernel(%arg0: i32, %arg1: i32, %arg2: memref<1x8x32xf32, #tpu.memory_space<vmem>>, %arg3: memref<1x8x32xf32, #tpu.memory_space<vmem>>, %arg4: memref<32x32xf32, #tpu.memory_space<vmem>>, %arg5: memref<1x32xf32, #tpu.memory_space<vmem>>, %arg6: memref<32x64xf32, #tpu.memory_space<vmem>>, %arg7: memref<1x64xf32, #tpu.memory_space<vmem>>, %arg8: memref<32x32xf32, #tpu.memory_space<vmem>>, %arg9: memref<1x32xf32, #tpu.memory_space<vmem>>, %arg10: memref<1x8x32xf32, #tpu.memory_space<vmem>>, %arg11: memref<1x4x8x8xf32, #tpu.memory_space<vmem>>) attributes {dimension_semantics = [#tpu.dimension_semantics<parallel>, #tpu.dimension_semantics<parallel>], iteration_bounds = array<i64: 2, 1>, scalar_prefetch = 0 : i64, scratch_operands = 0 : i64, tpu.core_type = #tpu.core_type<tc>, window_params = [{transform_indices = @transform_0, window_bounds = array<i64: 1, 8, 32>}, {transform_indices = @transform_1, window_bounds = array<i64: 1, 8, 32>}, {pipeline_mode = #tpu.pipeline_mode<synchronous>, transform_indices = @transform_2, window_bounds = array<i64: 32, 32>}, {pipeline_mode = #tpu.pipeline_mode<synchronous>, transform_indices = @transform_3, window_bounds = array<i64: 1, 32>}, {pipeline_mode = #tpu.pipeline_mode<synchronous>, transform_indices = @transform_4, window_bounds = array<i64: 32, 64>}, {pipeline_mode = #tpu.pipeline_mode<synchronous>, transform_indices = @transform_5, window_bounds = array<i64: 1, 64>}, {pipeline_mode = #tpu.pipeline_mode<synchronous>, transform_indices = @transform_6, window_bounds = array<i64: 32, 32>}, {pipeline_mode = #tpu.pipeline_mode<synchronous>, transform_indices = @transform_7, window_bounds = array<i64: 1, 32>}, {transform_indices = @transform_8, window_bounds = array<i64: 1, 8, 32>}, {transform_indices = @transform_9, window_bounds = array<i64: 1, 4, 8, 8>}]} {
    %c0 = arith.constant 0 : index
    %c0_0 = arith.constant 0 : index
    %c0_1 = arith.constant 0 : index
    %0 = vector.load %arg2[%c0, %c0_0, %c0_1] : memref<1x8x32xf32, #tpu.memory_space<vmem>>, vector<1x8x32xf32>
    %1 = vector.shape_cast %0 : vector<1x8x32xf32> to vector<8x32xf32>
    %2 = arith.truncf %1 : vector<8x32xf32> to vector<8x32xbf16>
    %c0_2 = arith.constant 0 : index
    %c0_3 = arith.constant 0 : index
    %c0_4 = arith.constant 0 : index
    %3 = vector.load %arg3[%c0_2, %c0_3, %c0_4] : memref<1x8x32xf32, #tpu.memory_space<vmem>>, vector<1x8x32xf32>
    %4 = vector.shape_cast %3 : vector<1x8x32xf32> to vector<8x32xf32>
    %5 = arith.truncf %4 : vector<8x32xf32> to vector<8x32xbf16>
    %c0_5 = arith.constant 0 : index
    %c0_6 = arith.constant 0 : index
    %6 = vector.load %arg4[%c0_5, %c0_6] : memref<32x32xf32, #tpu.memory_space<vmem>>, vector<32x32xf32>
    %7 = arith.truncf %6 : vector<32x32xf32> to vector<32x32xbf16>
    %cst = arith.constant dense<0.000000e+00> : vector<8x32xf32>
    %8 = tpu.matmul %2, %7, %cst {dimension_numbers = #tpu.dot_dimension_numbers<[1], [0], [0], [1], [0, 0, 1, 1], [], []>} : vector<8x32xbf16>, vector<32x32xbf16>, vector<8x32xf32> -> vector<8x32xf32>
    %c0_7 = arith.constant 0 : index
    %c0_8 = arith.constant 0 : index
    %9 = vector.load %arg5[%c0_7, %c0_8] : memref<1x32xf32, #tpu.memory_space<vmem>>, vector<1x32xf32>
    %10 = vector.broadcast %9 : vector<1x32xf32> to vector<8x32xf32>
    %11 = arith.addf %8, %10 : vector<8x32xf32>
    %c0_9 = arith.constant 0 : index
    %c0_10 = arith.constant 0 : index
    %12 = vector.load %arg6[%c0_9, %c0_10] : memref<32x64xf32, #tpu.memory_space<vmem>>, vector<32x64xf32>
    %13 = arith.truncf %12 : vector<32x64xf32> to vector<32x64xbf16>
    %cst_11 = arith.constant dense<0.000000e+00> : vector<8x64xf32>
    %14 = tpu.matmul %5, %13, %cst_11 {dimension_numbers = #tpu.dot_dimension_numbers<[1], [0], [0], [1], [0, 0, 1, 1], [], []>} : vector<8x32xbf16>, vector<32x64xbf16>, vector<8x64xf32> -> vector<8x64xf32>
    %c0_12 = arith.constant 0 : index
    %c0_13 = arith.constant 0 : index
    %15 = vector.load %arg7[%c0_12, %c0_13] : memref<1x64xf32, #tpu.memory_space<vmem>>, vector<1x64xf32>
    %16 = vector.broadcast %15 : vector<1x64xf32> to vector<8x64xf32>
    %17 = arith.addf %14, %16 : vector<8x64xf32>
    %18 = vector.extract_strided_slice %17 {offsets = [0, 0], sizes = [8, 32], strides = [1, 1]} : vector<8x64xf32> to vector<8x32xf32>
    %19 = vector.extract_strided_slice %17 {offsets = [0, 32], sizes = [8, 32], strides = [1, 1]} : vector<8x64xf32> to vector<8x32xf32>
    %20 = vector.shape_cast %11 : vector<8x32xf32> to vector<8x4x8xf32>
    %21 = tpu.transpose %20, [1, 0, 2] : vector<8x4x8xf32> -> vector<4x8x8xf32>
    %22 = arith.truncf %21 : vector<4x8x8xf32> to vector<4x8x8xbf16>
    %23 = vector.shape_cast %18 : vector<8x32xf32> to vector<8x4x8xf32>
    %24 = tpu.transpose %23, [1, 0, 2] : vector<8x4x8xf32> -> vector<4x8x8xf32>
    %25 = arith.truncf %24 : vector<4x8x8xf32> to vector<4x8x8xbf16>
    %26 = vector.shape_cast %19 : vector<8x32xf32> to vector<8x4x8xf32>
    %27 = tpu.transpose %26, [1, 0, 2] : vector<8x4x8xf32> -> vector<4x8x8xf32>
    %28 = arith.truncf %27 : vector<4x8x8xf32> to vector<4x8x8xbf16>
    %cst_14 = arith.constant dense<0.000000e+00> : vector<4x8x8xf32>
    %29 = tpu.matmul %22, %25, %cst_14 {dimension_numbers = #tpu.dot_dimension_numbers<[2], [2], [1], [1], [0, 0, 0, 1, 1, 1], [0], [0]>} : vector<4x8x8xbf16>, vector<4x8x8xbf16>, vector<4x8x8xf32> -> vector<4x8x8xf32>
    %cst_15 = arith.constant 0.353553385 : f32
    %30 = vector.broadcast %cst_15 : f32 to vector<4x8x8xf32>
    %31 = arith.mulf %29, %30 : vector<4x8x8xf32>
    %cst_16 = arith.constant dense<0xFF800000> : vector<4x8xf32>
    %32 = vector.multi_reduction <maximumf>, %31, %cst_16 [2] : vector<4x8x8xf32> to vector<4x8xf32>
    %33 = vector.shape_cast %32 : vector<4x8xf32> to vector<4x8x1xf32>
    %34 = vector.broadcast %33 : vector<4x8x1xf32> to vector<4x8x8xf32>
    %35 = arith.subf %31, %34 : vector<4x8x8xf32>
    %36 = math.exp %35 : vector<4x8x8xf32>
    %cst_17 = arith.constant dense<0.000000e+00> : vector<4x8xf32>
    %37 = vector.multi_reduction <add>, %36, %cst_17 [2] : vector<4x8x8xf32> to vector<4x8xf32>
    %38 = vector.shape_cast %37 : vector<4x8xf32> to vector<4x8x1xf32>
    %39 = tpu.reciprocal %38 {approx = true} : vector<4x8x1xf32> -> vector<4x8x1xf32>
    %40 = vector.broadcast %39 : vector<4x8x1xf32> to vector<4x8x8xf32>
    %41 = arith.mulf %36, %40 : vector<4x8x8xf32>
    %c0_18 = arith.constant 0 : index
    %c0_19 = arith.constant 0 : index
    %c0_20 = arith.constant 0 : index
    %c0_21 = arith.constant 0 : index
    %42 = vector.load %arg11[%c0_18, %c0_19, %c0_20, %c0_21] : memref<1x4x8x8xf32, #tpu.memory_space<vmem>>, vector<1x4x8x8xf32>
    %43 = vector.shape_cast %42 : vector<1x4x8x8xf32> to vector<4x8x8xf32>
    %44 = vector.shape_cast %41 : vector<4x8x8xf32> to vector<1x4x8x8xf32>
    tpu.vector_store %arg11[%c0_18, %c0_19, %c0_20, %c0_21], %44 {strides = array<i32>} : memref<1x4x8x8xf32, #tpu.memory_space<vmem>>, vector<1x4x8x8xf32>,
    %45 = arith.truncf %41 : vector<4x8x8xf32> to vector<4x8x8xbf16>
    %cst_22 = arith.constant dense<0.000000e+00> : vector<4x8x8xf32>
    %46 = tpu.matmul %45, %28, %cst_22 {dimension_numbers = #tpu.dot_dimension_numbers<[2], [1], [1], [2], [0, 0, 0, 1, 1, 2], [0], [0]>} : vector<4x8x8xbf16>, vector<4x8x8xbf16>, vector<4x8x8xf32> -> vector<4x8x8xf32>
    %47 = tpu.transpose %46, [1, 0, 2] : vector<4x8x8xf32> -> vector<8x4x8xf32>
    %48 = vector.shape_cast %47 : vector<8x4x8xf32> to vector<8x32xf32>
    %49 = arith.truncf %48 : vector<8x32xf32> to vector<8x32xbf16>
    %c0_23 = arith.constant 0 : index
    %c0_24 = arith.constant 0 : index
    %50 = vector.load %arg8[%c0_23, %c0_24] : memref<32x32xf32, #tpu.memory_space<vmem>>, vector<32x32xf32>
    %51 = arith.truncf %50 : vector<32x32xf32> to vector<32x32xbf16>
    %cst_25 = arith.constant dense<0.000000e+00> : vector<8x32xf32>
    %52 = tpu.matmul %49, %51, %cst_25 {dimension_numbers = #tpu.dot_dimension_numbers<[1], [0], [0], [1], [0, 0, 1, 1], [], []>} : vector<8x32xbf16>, vector<32x32xbf16>, vector<8x32xf32> -> vector<8x32xf32>
    %c0_26 = arith.constant 0 : index
    %c0_27 = arith.constant 0 : index
    %53 = vector.load %arg9[%c0_26, %c0_27] : memref<1x32xf32, #tpu.memory_space<vmem>>, vector<1x32xf32>
    %54 = vector.broadcast %53 : vector<1x32xf32> to vector<8x32xf32>
    %55 = arith.addf %52, %54 : vector<8x32xf32>
    %c0_28 = arith.constant 0 : index
    %c0_29 = arith.constant 0 : index
    %c0_30 = arith.constant 0 : index
    %56 = vector.load %arg10[%c0_28, %c0_29, %c0_30] : memref<1x8x32xf32, #tpu.memory_space<vmem>>, vector<1x8x32xf32>
    %57 = vector.shape_cast %56 : vector<1x8x32xf32> to vector<8x32xf32>
    %58 = vector.shape_cast %55 : vector<8x32xf32> to vector<1x8x32xf32>
    tpu.vector_store %arg10[%c0_28, %c0_29, %c0_30], %58 {strides = array<i32>} : memref<1x8x32xf32, #tpu.memory_space<vmem>>, vector<1x8x32xf32>,
    return
  }
  func.func @transform_0(%arg0: i32, %arg1: i32) -> (i32, i32, i32) {
    %c0_i32 = arith.constant 0 : i32
    %c0_i32_0 = arith.constant 0 : i32
    return %arg0, %arg1, %c0_i32 : i32, i32, i32
  }
  func.func @transform_1(%arg0: i32, %arg1: i32) -> (i32, i32, i32) {
    %c0_i32 = arith.constant 0 : i32
    %c0_i32_0 = arith.constant 0 : i32
    %c0_i32_1 = arith.constant 0 : i32
    return %arg0, %c0_i32, %c0_i32_0 : i32, i32, i32
  }
  func.func @transform_2(%arg0: i32, %arg1: i32) -> (i32, i32) {
    %c0_i32 = arith.constant 0 : i32
    %c0_i32_0 = arith.constant 0 : i32
    %c0_i32_1 = arith.constant 0 : i32
    return %c0_i32, %c0_i32_0 : i32, i32
  }
  func.func @transform_3(%arg0: i32, %arg1: i32) -> (i32, i32) {
    %c0_i32 = arith.constant 0 : i32
    %c0_i32_0 = arith.constant 0 : i32
    %c0_i32_1 = arith.constant 0 : i32
    return %c0_i32, %c0_i32_0 : i32, i32
  }
  func.func @transform_4(%arg0: i32, %arg1: i32) -> (i32, i32) {
    %c0_i32 = arith.constant 0 : i32
    %c0_i32_0 = arith.constant 0 : i32
    %c0_i32_1 = arith.constant 0 : i32
    return %c0_i32, %c0_i32_0 : i32, i32
  }
  func.func @transform_5(%arg0: i32, %arg1: i32) -> (i32, i32) {
    %c0_i32 = arith.constant 0 : i32
    %c0_i32_0 = arith.constant 0 : i32
    %c0_i32_1 = arith.constant 0 : i32
    return %c0_i32, %c0_i32_0 : i32, i32
  }
  func.func @transform_6(%arg0: i32, %arg1: i32) -> (i32, i32) {
    %c0_i32 = arith.constant 0 : i32
    %c0_i32_0 = arith.constant 0 : i32
    %c0_i32_1 = arith.constant 0 : i32
    return %c0_i32, %c0_i32_0 : i32, i32
  }
  func.func @transform_7(%arg0: i32, %arg1: i32) -> (i32, i32) {
    %c0_i32 = arith.constant 0 : i32
    %c0_i32_0 = arith.constant 0 : i32
    %c0_i32_1 = arith.constant 0 : i32
    return %c0_i32, %c0_i32_0 : i32, i32
  }
  func.func @transform_8(%arg0: i32, %arg1: i32) -> (i32, i32, i32) {
    %c0_i32 = arith.constant 0 : i32
    %c0_i32_0 = arith.constant 0 : i32
    return %arg0, %arg1, %c0_i32 : i32, i32, i32
  }
  func.func @transform_9(%arg0: i32, %arg1: i32) -> (i32, i32, i32, i32) {
    %c0_i32 = arith.constant 0 : i32
    %c0_i32_0 = arith.constant 0 : i32
    %c0_i32_1 = arith.constant 0 : i32
    return %arg0, %c0_i32, %arg1, %c0_i32_0 : i32, i32, i32, i32
  }
}

</mosaic_0001>

<llo_original>
// kernel: tpu_custom_call.1
$region0: #{tpu_custom_call.1}
  #allocation0 [shape = 'u32[]', space=smem, size = 0x4, offset = 0x4, fixed_abs, tag = 'smem constant byte address 0x4 - core index']
  #allocation1 [shape = 'u32[144,128]{1,0:T(1,128)}', space=vmem, size = 0x12000, scoped, tag = 'internal scratch']
  %s0 = inlined_call_operand.hbm [shape: f32[2,8,32], index: 0, kind: input, shape index: {}]
  %s1 = inlined_call_operand.hbm [shape: f32[2,8,32], index: 1, kind: input, shape index: {}]
  %s2 = inlined_call_operand.hbm [shape: f32[32,32], index: 2, kind: input, shape index: {}]
  %s3 = inlined_call_operand.vmem [shape: f32[1,32], index: 3, kind: input, shape index: {}]
  %s4 = inlined_call_operand.hbm [shape: f32[32,64], index: 4, kind: input, shape index: {}]
  %s5 = inlined_call_operand.vmem [shape: f32[1,64], index: 5, kind: input, shape index: {}]
  %s6 = inlined_call_operand.hbm [shape: f32[32,32], index: 6, kind: input, shape index: {}]
  %s7 = inlined_call_operand.vmem [shape: f32[1,32], index: 7, kind: input, shape index: {}]
  %s8 = inlined_call_operand.hbm [shape: f32[2,8,32], index: 8, kind: output, shape index: {0}]
  %s9 = inlined_call_operand.hbm [shape: f32[2,4,8,8], index: 9, kind: output, shape index: {1}]
  %10 = xla_tuple %s8, %s9
  %s11 = sld [smem:[#allocation0]]
  $region93: #{tpu_custom_call.1} parent=0
    _
  %s13 = ssub.s32 1, %s11
  %s14 = scalar_select 0, %s13, %s11
  $region1: #{tpu_custom_call.1} parent=0
    #allocation2 [shape = 'u8[8192]{0}', space=vmem, size = 0x2000, scoped, tag = 'input window, operand 0']
    #allocation3 [shape = 's32[2]{0}', space=sflag, size = 0x8, scoped, tag = 'scoped memory for tpu_custom_call.1']
    #allocation4 [shape = 's32[2]{0}', space=sflag, size = 0x8, scoped, tag = 'scoped memory for tpu_custom_call.1']
    #allocation5 [shape = 'u8[8192]{0}', space=vmem, size = 0x2000, scoped, tag = 'input window, operand 1']
    #allocation6 [shape = 's32[2]{0}', space=sflag, size = 0x8, scoped, tag = 'scoped memory for tpu_custom_call.1']
    #allocation7 [shape = 'u8[16384]{0}', space=vmem, size = 0x4000, scoped, tag = 'input window, operand 2, single buffered']
    #allocation8 [shape = 'u8[16384]{0}', space=vmem, size = 0x4000, scoped, tag = 'input window, operand 4, single buffered']
    #allocation9 [shape = 's32[1]{0}', space=sflag, size = 0x4, scoped, tag = 'scoped memory for tpu_custom_call.1']
    #allocation10 [shape = 'u8[16384]{0}', space=vmem, size = 0x4000, scoped, tag = 'input window, operand 6, single buffered']
    #allocation11 [shape = 'u8[8192]{0}', space=vmem, size = 0x2000, scoped, tag = 'output window, operand 0']
    #allocation12 [shape = 'u8[32768]{0}', space=vmem, size = 0x8000, scoped, tag = 'output window, operand 1']
    #allocation13 [shape = 's32[2]{0}', space=sflag, size = 0x8, scoped, tag = 'scoped memory for tpu_custom_call.1']
    %15 = vsyncpa [#allocation3], 0
    %s16 = scalar_lea.sflag [#allocation3], 1
    %17 = vsyncpa %s16, 0
    %18 = vsyncpa [#allocation6], 0
    %s19 = scalar_lea.sflag [#allocation6], 1
    %20 = vsyncpa %s19, 0
    %21 = vsyncpa [#allocation9], 0
    %22 = vsyncpa [#allocation4], 0
    %s23 = scalar_lea.sflag [#allocation4], 1
    %24 = vsyncpa %s23, 0
    %25 = vsyncpa [#allocation13], 0
    %s26 = scalar_lea.sflag [#allocation13], 1
    %27 = vsyncpa %s26, 0
    loop: start=0, step=1, limit=4
    $region2: #{tpu_custom_call.1} parent=1 // loop_pre_header
      _
    $region3: #{tpu_custom_call.1} parent=1 // loop_header
      %s29 = sphi 0, %s33
      %p30 = scmp.ge.s32.totalorder %s29, 4
      %s36 = sphi 0, %s48
      %s37 = sphi 0, %s44
      %s38 = sphi 0, %s36
      %s39 = sphi 0, %s37
      %s40 = sphi 0, %s38
      %s41 = sphi 0, %s39
      %s53 = sphi 0, %s55
      %s56 = sphi 0, %s53
      %s57 = sphi 0, %s56
      %s73 = sphi 0, %s57
      %s79 = sphi 0, %s81
      %s82 = sphi 0, %s79
      %s83 = sphi 0, %s82
      %s99 = sphi 0, %s83
      %s103 = sphi 0, %s103
      %s105 = sphi 0, %s103
      %s106 = sphi 0, %s105
      %s120 = sphi 0, %s106
      %s124 = sphi 0, %s124
      %s126 = sphi 0, %s124
      %s127 = sphi 0, %s126
      %s141 = sphi 0, %s127
      %s145 = sphi 0, %s145
      %s147 = sphi 0, %s145
      %s148 = sphi 0, %s147
      %s162 = sphi 0, %s148
      %s166 = sphi 0, %s166
      %s168 = sphi 0, %s166
      %s169 = sphi 0, %s168
      %s183 = sphi 0, %s169
      %s187 = sphi 0, %s187
      %s189 = sphi 0, %s187
      %s190 = sphi 0, %s189
      %s204 = sphi 0, %s190
      %s208 = sphi 0, %s208
      %s210 = sphi 0, %s208
      %s211 = sphi 0, %s210
      %s225 = sphi 0, %s211
      %s233 = sphi 0, %s235
      %s236 = sphi 0, %s233
      %s237 = sphi 0, %s236
      %s253 = sphi 0, %s237
      %s261 = sphi 0, %s263
      %s264 = sphi 0, %s261
      %s265 = sphi 0, %s264
      %s281 = sphi 0, %s265
    $region4: #{tpu_custom_call.1} parent=1 // loop_header_branch
      %32 = sbr.rel (%p30) target = $region8
    $region5: #{tpu_custom_call.1} parent=1 // loop_body
      %s34 = ssub.s32 %s29, 1
      %s35 = ssub.s32 %s29, 2
      %s42 = sadd.s32 1, %s37
      %p43 = scmp.ge.s32.totalorder %s42, 1
      %s44 = scalar_select %p43, 0, %s42
      %s45 = sadd.s32 1, %s36
      %s46 = scalar_select %p43, %s45, %s36
      %p47 = scmp.ge.s32.totalorder %s46, 2
      %s48 = scalar_select %p47, 0, %s46
      %s49 = ssub.s32 %s36, %s48
      %s50 = ssub.s32 %s37, %s44
      %s51 = sor.u32 %s49, %s50
      %p52 = scmp.eq.s32.totalorder %s51, 0
      %s54 = sadd.s32 %s53, 1
      %s55 = scalar_select %p52, %s53, %s54
      %p58 = pneg %p52
      %p59 = scmp.eq.s32.totalorder %s29, 1
      %p60 = por %p58, %p59
      %p61 = scmp.ne.s32.totalorder %s53, %s56
      %p62 = scmp.eq.s32.totalorder %s29, 0
      %p63 = por %p61, %p62
      %p64 = scmp.ne.s32.totalorder %s53, %s56
      %p65 = scmp.eq.s32.totalorder %s34, 1
      %p66 = por %p64, %p65
      %p67 = scmp.ne.s32.totalorder %s56, %s57
      %p68 = scmp.eq.s32.totalorder %s34, 0
      %p69 = por %p67, %p68
      %p70 = scmp.ne.s32.totalorder %s56, %s57
      %p71 = scmp.eq.s32.totalorder %s35, 1
      %p72 = por %p70, %p71
      %p74 = scmp.ne.s32.totalorder %s57, %s73
      %p75 = scmp.eq.s32.totalorder %s35, 0
      %p76 = por %p74, %p75
      %s77 = ssub.s32 %s36, %s48
      %p78 = scmp.eq.s32.totalorder %s77, 0
      %s80 = sadd.s32 %s79, 1
      %s81 = scalar_select %p78, %s79, %s80
      %p84 = pneg %p78
      %p85 = scmp.eq.s32.totalorder %s29, 1
      %p86 = por %p84, %p85
      %p87 = scmp.ne.s32.totalorder %s79, %s82
      %p88 = scmp.eq.s32.totalorder %s29, 0
      %p89 = por %p87, %p88
      %p90 = scmp.ne.s32.totalorder %s79, %s82
      %p91 = scmp.eq.s32.totalorder %s34, 1
      %p92 = por %p90, %p91
      %p93 = scmp.ne.s32.totalorder %s82, %s83
      %p94 = scmp.eq.s32.totalorder %s34, 0
      %p95 = por %p93, %p94
      %p96 = scmp.ne.s32.totalorder %s82, %s83
      %p97 = scmp.eq.s32.totalorder %s35, 1
      %p98 = por %p96, %p97
      %p100 = scmp.ne.s32.totalorder %s83, %s99
      %p101 = scmp.eq.s32.totalorder %s35, 0
      %p102 = por %p100, %p101
      %s104 = sadd.s32 %s103, 1
      %p107 = scmp.eq.s32.totalorder %s29, 1
      %p108 = scmp.ne.s32.totalorder %s103, %s105
      %p109 = scmp.eq.s32.totalorder %s29, 0
      %p110 = por %p108, %p109
      %p111 = scmp.ne.s32.totalorder %s103, %s105
      %p112 = scmp.eq.s32.totalorder %s34, 1
      %p113 = por %p111, %p112
      %p114 = scmp.ne.s32.totalorder %s105, %s106
      %p115 = scmp.eq.s32.totalorder %s34, 0
      %p116 = por %p114, %p115
      %p117 = scmp.ne.s32.totalorder %s105, %s106
      %p118 = scmp.eq.s32.totalorder %s35, 1
      %p119 = por %p117, %p118
      %p121 = scmp.ne.s32.totalorder %s106, %s120
      %p122 = scmp.eq.s32.totalorder %s35, 0
      %p123 = por %p121, %p122
      %s125 = sadd.s32 %s124, 1
      %p128 = scmp.eq.s32.totalorder %s29, 1
      %p129 = scmp.ne.s32.totalorder %s124, %s126
      %p130 = scmp.eq.s32.totalorder %s29, 0
      %p131 = por %p129, %p130
      %p132 = scmp.ne.s32.totalorder %s124, %s126
      %p133 = scmp.eq.s32.totalorder %s34, 1
      %p134 = por %p132, %p133
      %p135 = scmp.ne.s32.totalorder %s126, %s127
      %p136 = scmp.eq.s32.totalorder %s34, 0
      %p137 = por %p135, %p136
      %p138 = scmp.ne.s32.totalorder %s126, %s127
      %p139 = scmp.eq.s32.totalorder %s35, 1
      %p140 = por %p138, %p139
      %p142 = scmp.ne.s32.totalorder %s127, %s141
      %p143 = scmp.eq.s32.totalorder %s35, 0
      %p144 = por %p142, %p143
      %s146 = sadd.s32 %s145, 1
      %p149 = scmp.eq.s32.totalorder %s29, 1
      %p150 = scmp.ne.s32.totalorder %s145, %s147
      %p151 = scmp.eq.s32.totalorder %s29, 0
      %p152 = por %p150, %p151
      %p153 = scmp.ne.s32.totalorder %s145, %s147
      %p154 = scmp.eq.s32.totalorder %s34, 1
      %p155 = por %p153, %p154
      %p156 = scmp.ne.s32.totalorder %s147, %s148
      %p157 = scmp.eq.s32.totalorder %s34, 0
      %p158 = por %p156, %p157
      %p159 = scmp.ne.s32.totalorder %s147, %s148
      %p160 = scmp.eq.s32.totalorder %s35, 1
      %p161 = por %p159, %p160
      %p163 = scmp.ne.s32.totalorder %s148, %s162
      %p164 = scmp.eq.s32.totalorder %s35, 0
      %p165 = por %p163, %p164
      %s167 = sadd.s32 %s166, 1
      %p170 = scmp.eq.s32.totalorder %s29, 1
      %p171 = scmp.ne.s32.totalorder %s166, %s168
      %p172 = scmp.eq.s32.totalorder %s29, 0
      %p173 = por %p171, %p172
      %p174 = scmp.ne.s32.totalorder %s166, %s168
      %p175 = scmp.eq.s32.totalorder %s34, 1
      %p176 = por %p174, %p175
      %p177 = scmp.ne.s32.totalorder %s168, %s169
      %p178 = scmp.eq.s32.totalorder %s34, 0
      %p179 = por %p177, %p178
      %p180 = scmp.ne.s32.totalorder %s168, %s169
      %p181 = scmp.eq.s32.totalorder %s35, 1
      %p182 = por %p180, %p181
      %p184 = scmp.ne.s32.totalorder %s169, %s183
      %p185 = scmp.eq.s32.totalorder %s35, 0
      %p186 = por %p184, %p185
      %s188 = sadd.s32 %s187, 1
      %p191 = scmp.eq.s32.totalorder %s29, 1
      %p192 = scmp.ne.s32.totalorder %s187, %s189
      %p193 = scmp.eq.s32.totalorder %s29, 0
      %p194 = por %p192, %p193
      %p195 = scmp.ne.s32.totalorder %s187, %s189
      %p196 = scmp.eq.s32.totalorder %s34, 1
      %p197 = por %p195, %p196
      %p198 = scmp.ne.s32.totalorder %s189, %s190
      %p199 = scmp.eq.s32.totalorder %s34, 0
      %p200 = por %p198, %p199
      %p201 = scmp.ne.s32.totalorder %s189, %s190
      %p202 = scmp.eq.s32.totalorder %s35, 1
      %p203 = por %p201, %p202
      %p205 = scmp.ne.s32.totalorder %s190, %s204
      %p206 = scmp.eq.s32.totalorder %s35, 0
      %p207 = por %p205, %p206
      %s209 = sadd.s32 %s208, 1
      %p212 = scmp.eq.s32.totalorder %s29, 1
      %p213 = scmp.ne.s32.totalorder %s208, %s210
      %p214 = scmp.eq.s32.totalorder %s29, 0
      %p215 = por %p213, %p214
      %p216 = scmp.ne.s32.totalorder %s208, %s210
      %p217 = scmp.eq.s32.totalorder %s34, 1
      %p218 = por %p216, %p217
      %p219 = scmp.ne.s32.totalorder %s210, %s211
      %p220 = scmp.eq.s32.totalorder %s34, 0
      %p221 = por %p219, %p220
      %p222 = scmp.ne.s32.totalorder %s210, %s211
      %p223 = scmp.eq.s32.totalorder %s35, 1
      %p224 = por %p222, %p223
      %p226 = scmp.ne.s32.totalorder %s211, %s225
      %p227 = scmp.eq.s32.totalorder %s35, 0
      %p228 = por %p226, %p227
      %s229 = ssub.s32 %s36, %s48
      %s230 = ssub.s32 %s37, %s44
      %s231 = sor.u32 %s229, %s230
      %p232 = scmp.eq.s32.totalorder %s231, 0
      %s234 = sadd.s32 %s233, 1
      %s235 = scalar_select %p232, %s233, %s234
      %p238 = pneg %p232
      %p239 = scmp.eq.s32.totalorder %s29, 1
      %p240 = por %p238, %p239
      %p241 = scmp.ne.s32.totalorder %s233, %s236
      %p242 = scmp.eq.s32.totalorder %s29, 0
      %p243 = por %p241, %p242
      %p244 = scmp.ne.s32.totalorder %s233, %s236
      %p245 = scmp.eq.s32.totalorder %s34, 1
      %p246 = por %p244, %p245
      %p247 = scmp.ne.s32.totalorder %s236, %s237
      %p248 = scmp.eq.s32.totalorder %s34, 0
      %p249 = por %p247, %p248
      %p250 = scmp.ne.s32.totalorder %s236, %s237
      %p251 = scmp.eq.s32.totalorder %s35, 1
      %p252 = por %p250, %p251
      %p254 = scmp.ne.s32.totalorder %s237, %s253
      %p255 = scmp.eq.s32.totalorder %s35, 0
      %p256 = por %p254, %p255
      %s257 = ssub.s32 %s36, %s48
      %s258 = ssub.s32 %s37, %s44
      %s259 = sor.u32 %s257, %s258
      %p260 = scmp.eq.s32.totalorder %s259, 0
      %s262 = sadd.s32 %s261, 1
      %s263 = scalar_select %p260, %s261, %s262
      %p266 = pneg %p260
      %p267 = scmp.eq.s32.totalorder %s29, 1
      %p268 = por %p266, %p267
      %p269 = scmp.ne.s32.totalorder %s261, %s264
      %p270 = scmp.eq.s32.totalorder %s29, 0
      %p271 = por %p269, %p270
      %p272 = scmp.ne.s32.totalorder %s261, %s264
      %p273 = scmp.eq.s32.totalorder %s34, 1
      %p274 = por %p272, %p273
      %p275 = scmp.ne.s32.totalorder %s264, %s265
      %p276 = scmp.eq.s32.totalorder %s34, 0
      %p277 = por %p275, %p276
      %p278 = scmp.ne.s32.totalorder %s264, %s265
      %p279 = scmp.eq.s32.totalorder %s35, 1
      %p280 = por %p278, %p279
      %p282 = scmp.ne.s32.totalorder %s265, %s281
      %p283 = scmp.eq.s32.totalorder %s35, 0
      %p284 = por %p282, %p283
      %p285 = scmp.le.s32.totalorder 1, %s29
      %p286 = scmp.lt.s32.totalorder %s29, 3
      %p287 = pnand %p285, %p286
      %p288 = pneg %p287
      // Predicated region
      $region9: #{tpu_custom_call.1} parent=5 // pred_check
        _
      $region10: #{tpu_custom_call.1} parent=5 // pred_check_branch
        %290 = sbr.rel (%p287) target = $region12
      $region11: #{tpu_custom_call.1} parent=5 // pred_region
        %s291 = ssub.s32 %s29, 1
        // Predicated region
        $region13: #{tpu_custom_call.1} parent=11 // pred_check
          %p292 = pneg %p116
        $region14: #{tpu_custom_call.1} parent=11 // pred_check_branch
          %294 = sbr.rel (%p292) target = $region16
        $region15: #{tpu_custom_call.1} parent=11 // pred_region
          %s296 = ssub.s32 512, 512
          %297 = vsyncadd [#allocation6], %s296
          %s298 = sshll.u32 [#allocation7], 4
          %s299 = int_to_ptr.vmem [resolvable:$true] %s298
          %304 = dma.hbm_to_vmem [thread:$0]  %s2, 512, %s299, [#allocation6], 128, 128, 8
        $region16: #{tpu_custom_call.1} parent=11 // pred_fallthru
          _
        // Predicated region
        $region17: #{tpu_custom_call.1} parent=11 // pred_check
          %p305 = pneg %p137
        $region18: #{tpu_custom_call.1} parent=11 // pred_check_branch
          %307 = sbr.rel (%p305) target = $region20
        $region19: #{tpu_custom_call.1} parent=11 // pred_region
          _
        $region20: #{tpu_custom_call.1} parent=11 // pred_fallthru
          _
        // Predicated region
        $region21: #{tpu_custom_call.1} parent=11 // pred_check
          %p308 = pneg %p158
        $region22: #{tpu_custom_call.1} parent=11 // pred_check_branch
          %310 = sbr.rel (%p308) target = $region24
        $region23: #{tpu_custom_call.1} parent=11 // pred_region
          %s312 = ssub.s32 512, 512
          %313 = vsyncadd [#allocation9], %s312
          %s314 = sshll.u32 [#allocation8], 4
          %s315 = int_to_ptr.vmem [resolvable:$true] %s314
          %320 = dma.hbm_to_vmem [thread:$0]  %s4, 512, %s315, [#allocation9], 128, 128, 8
        $region24: #{tpu_custom_call.1} parent=11 // pred_fallthru
          _
        // Predicated region
        $region25: #{tpu_custom_call.1} parent=11 // pred_check
          %p321 = pneg %p179
        $region26: #{tpu_custom_call.1} parent=11 // pred_check_branch
          %323 = sbr.rel (%p321) target = $region28
        $region27: #{tpu_custom_call.1} parent=11 // pred_region
          _
        $region28: #{tpu_custom_call.1} parent=11 // pred_fallthru
          _
        // Predicated region
        $region29: #{tpu_custom_call.1} parent=11 // pred_check
          %p324 = pneg %p200
        $region30: #{tpu_custom_call.1} parent=11 // pred_check_branch
          %326 = sbr.rel (%p324) target = $region32
        $region31: #{tpu_custom_call.1} parent=11 // pred_region
          %s328 = ssub.s32 512, 512
          %329 = vsyncadd [#allocation9], %s328
          %s330 = sshll.u32 [#allocation10], 4
          %s331 = int_to_ptr.vmem [resolvable:$true] %s330
          %336 = dma.hbm_to_vmem [thread:$0]  %s6, 512, %s331, [#allocation9], 128, 128, 8
        $region32: #{tpu_custom_call.1} parent=11 // pred_fallthru
          _
        // Predicated region
        $region33: #{tpu_custom_call.1} parent=11 // pred_check
          %p337 = pneg %p221
        $region34: #{tpu_custom_call.1} parent=11 // pred_check_branch
          %339 = sbr.rel (%p337) target = $region36
        $region35: #{tpu_custom_call.1} parent=11 // pred_region
          _
        $region36: #{tpu_custom_call.1} parent=11 // pred_fallthru
          _
      $region12: #{tpu_custom_call.1} parent=5 // pred_fallthru
        _
      %p340 = scmp.lt.s32.totalorder %s29, 2
      // Predicated region
      $region37: #{tpu_custom_call.1} parent=5 // pred_check
        %p341 = pneg %p340
      $region38: #{tpu_custom_call.1} parent=5 // pred_check_branch
        %343 = sbr.rel (%p341) target = $region40
      $region39: #{tpu_custom_call.1} parent=5 // pred_region
        // Predicated region
        $region41: #{tpu_custom_call.1} parent=39 // pred_check
          %p344 = pneg %p63
        $region42: #{tpu_custom_call.1} parent=39 // pred_check_branch
          %346 = sbr.rel (%p344) target = $region44
        $region43: #{tpu_custom_call.1} parent=39 // pred_region
          %s347 = sand.u32 %s53, 1
          %s348 = scalar_lea.sflag [#allocation3], %s347
          %s349 = sand.u32 %s53, 1
          %s350 = smul.addr %s349, 8
          %s351 = scalar_lea.vmem [#allocation2], %s350
          %s353 = ssub.s32 128, 128
          %354 = vsyncadd %s348, %s353
          %s355 = sadd.s32 %s37, %s36
          %s356 = smul.addr %s355, 128
          %s357 = scalar_lea.hbm %s0, %s356
          %s359 = sshll.u32 %s351, 4
          %s360 = int_to_ptr.vmem [resolvable:$true] %s359
          %362 = dma.hbm_to_vmem [thread:$0]  %s357, 128, %s360, %s348
        $region44: #{tpu_custom_call.1} parent=39 // pred_fallthru
          _
        // Predicated region
        $region45: #{tpu_custom_call.1} parent=39 // pred_check
          %p363 = pneg %p89
        $region46: #{tpu_custom_call.1} parent=39 // pred_check_branch
          %365 = sbr.rel (%p363) target = $region48
        $region47: #{tpu_custom_call.1} parent=39 // pred_region
          %s366 = sand.u32 %s29, 1
          %s367 = scalar_lea.sflag [#allocation6], %s366
          %s368 = sand.u32 %s79, 1
          %s369 = smul.addr %s368, 8
          %s370 = scalar_lea.vmem [#allocation5], %s369
          %s372 = ssub.s32 128, 128
          %373 = vsyncadd %s367, %s372
          %s374 = smul.addr %s36, 128
          %s375 = scalar_lea.hbm %s1, %s374
          %s377 = sshll.u32 %s370, 4
          %s378 = int_to_ptr.vmem [resolvable:$true] %s377
          %380 = dma.hbm_to_vmem [thread:$0]  %s375, 128, %s378, %s367
        $region48: #{tpu_custom_call.1} parent=39 // pred_fallthru
          _
      $region40: #{tpu_custom_call.1} parent=5 // pred_fallthru
        _
      %p381 = scmp.le.s32.totalorder 1, %s29
      %p382 = scmp.lt.s32.totalorder %s29, 3
      %p383 = pnand %p381, %p382
      %p384 = pneg %p383
      // Predicated region
      $region49: #{tpu_custom_call.1} parent=5 // pred_check
        _
      $region50: #{tpu_custom_call.1} parent=5 // pred_check_branch
        %386 = sbr.rel (%p383) target = $region52
      $region51: #{tpu_custom_call.1} parent=5 // pred_region
        %s387 = ssub.s32 %s29, 1
        %s388 = sand.u32 %s56, 1
        %s389 = scalar_lea.sflag [#allocation3], %s388
        %s390 = sand.u32 %s56, 1
        %s391 = smul.addr %s390, 8
        %s392 = scalar_lea.vmem [#allocation2], %s391
        // Predicated region
        $region53: #{tpu_custom_call.1} parent=51 // pred_check
          %p393 = pneg %p69
        $region54: #{tpu_custom_call.1} parent=51 // pred_check_branch
          %395 = sbr.rel (%p393) target = $region56
        $region55: #{tpu_custom_call.1} parent=51 // pred_region
          %396 = dma.done %s389, 128
        $region56: #{tpu_custom_call.1} parent=51 // pred_fallthru
          _
        %s397 = sand.u32 %s34, 1
        %s398 = scalar_lea.sflag [#allocation6], %s397
        %s399 = sand.u32 %s82, 1
        %s400 = smul.addr %s399, 8
        %s401 = scalar_lea.vmem [#allocation5], %s400
        // Predicated region
        $region57: #{tpu_custom_call.1} parent=51 // pred_check
          %p402 = pneg %p95
        $region58: #{tpu_custom_call.1} parent=51 // pred_check_branch
          %404 = sbr.rel (%p402) target = $region60
        $region59: #{tpu_custom_call.1} parent=51 // pred_region
          %405 = dma.done %s398, 128
        $region60: #{tpu_custom_call.1} parent=51 // pred_fallthru
          _
        // Predicated region
        $region61: #{tpu_custom_call.1} parent=51 // pred_check
          %p406 = pneg %p116
        $region62: #{tpu_custom_call.1} parent=51 // pred_check_branch
          %408 = sbr.rel (%p406) target = $region64
        $region63: #{tpu_custom_call.1} parent=51 // pred_region
          %409 = dma.done [#allocation6], 512
        $region64: #{tpu_custom_call.1} parent=51 // pred_fallthru
          _
        // Predicated region
        $region65: #{tpu_custom_call.1} parent=51 // pred_check
          %p410 = pneg %p158
        $region66: #{tpu_custom_call.1} parent=51 // pred_check_branch
          %412 = sbr.rel (%p410) target = $region68
        $region67: #{tpu_custom_call.1} parent=51 // pred_region
          %413 = dma.done [#allocation9], 512
        $region68: #{tpu_custom_call.1} parent=51 // pred_fallthru
          _
        // Predicated region
        $region69: #{tpu_custom_call.1} parent=51 // pred_check
          %p414 = pneg %p200
        $region70: #{tpu_custom_call.1} parent=51 // pred_check_branch
          %416 = sbr.rel (%p414) target = $region72
        $region71: #{tpu_custom_call.1} parent=51 // pred_region
          %417 = dma.done [#allocation9], 512
        $region72: #{tpu_custom_call.1} parent=51 // pred_fallthru
          _
        %s418 = sand.u32 %s56, 1
        %s419 = scalar_lea.sflag [#allocation3], %s418
        %s420 = sand.u32 %s56, 1
        %s421 = smul.addr %s420, 8
        %s422 = scalar_lea.vmem [#allocation2], %s421
        %p423 = pneg %p69
        %p424 = pneg %p66
        %s425 = sand.u32 %s34, 1
        %s426 = scalar_lea.sflag [#allocation6], %s425
        %s427 = sand.u32 %s82, 1
        %s428 = smul.addr %s427, 8
        %s429 = scalar_lea.vmem [#allocation5], %s428
        %p430 = pneg %p95
        %p431 = pneg %p92
        %p432 = pneg %p116
        %p433 = pneg %p113
        %p434 = pneg %p137
        %p435 = pneg %p134
        %p436 = pneg %p158
        %p437 = pneg %p155
        %p438 = pneg %p179
        %p439 = pneg %p176
        %p440 = pneg %p200
        %p441 = pneg %p197
        %p442 = pneg %p221
        %p443 = pneg %p218
        %p444 = pneg %p249
        %p445 = pneg %p246
        %s446 = sand.u32 %s236, 1
        %s447 = scalar_lea.sflag [#allocation4], %s446
        %s448 = sand.u32 %s236, 1
        %s449 = smul.addr %s448, 8
        %s450 = scalar_lea.vmem [#allocation11], %s449
        %p451 = pneg %p277
        %p452 = pneg %p274
        %s453 = sand.u32 %s264, 1
        %s454 = scalar_lea.sflag [#allocation13], %s453
        %s455 = sand.u32 %s264, 1
        %s456 = smul.addr %s455, 32
        %s457 = scalar_lea.vmem [#allocation12], %s456
        %v459 = vld [vmem:[%s392] sm:$0xff]
        %v460 = vpack.c.bf16 %v459, %v459
        %v461 = vld [vmem:[%s401] sm:$0xff]
        %v462 = vpack.c.bf16 %v461, %v461
        %v463 = vld [vmem:[#allocation7] sm:$0xff]
        %v464 = vld [vmem:[#allocation7 + $0x8] sm:$0xff]
        %v465 = vld [vmem:[#allocation7 + $0x10] sm:$0xff]
        %v466 = vld [vmem:[#allocation7 + $0x18] sm:$0xff]
        %v467 = vpack.c.bf16 %v464, %v463
        %v468 = vpack.c.bf16 %v466, %v465
        %v469 = vld [vmem:[%s3] sm:$0x1]
        %v471 = vlaneseq
        %v472 = vshrl.u32 %v471, 7
        %v473 = vsub.s32 0, %v472
        %v474 = vrot.slane %v469, %v473
        %vm476 = vcmask 261120
        %v478 = vsel %vm476, %v460, 0
        %480 = vmatprep.subr.bf16.mxu0 0
        %481 = vmatpush1.bf16.msra.mxu0 %v467
        %482 = vmatprep.subr.bf16.mxu0 0
        %483 = vmatpush1.bf16.msra.mxu0 %v468
        %484 = vmatprep.subr.bf16.mxu0 0
        %485 = vmatpush1.bf16.msra.mxu0 0
        %486 = vmatprep.subr.bf16.mxu0 0
        %487 = vmatpush1.bf16.msra.mxu0 0
        %488 = vmatprep.subr.bf16.mxu0 0
        %489 = vmatpush1.bf16.msra.mxu0 0
        %490 = vmatprep.subr.bf16.mxu0 0
        %491 = vmatpush1.bf16.msra.mxu0 0
        %492 = vmatprep.subr.bf16.mxu0 0
        %493 = vmatpush1.bf16.msra.mxu0 0
        %494 = vmatprep.subr.bf16.mxu0 0
        %495 = vmatpush1.bf16.msra.mxu0 0
        %496 = vmatprep.subr.bf16.mxu0 0
        %497 = vmatpush1.bf16.msra.mxu0 0
        %498 = vmatprep.subr.bf16.mxu0 0
        %499 = vmatpush1.bf16.msra.mxu0 0
        %500 = vmatprep.subr.bf16.mxu0 0
        %501 = vmatpush1.bf16.msra.mxu0 0
        %502 = vmatprep.subr.bf16.mxu0 0
        %503 = vmatpush1.bf16.msra.mxu0 0
        %504 = vmatprep.subr.bf16.mxu0 0
        %505 = vmatpush1.bf16.msra.mxu0 0
        %506 = vmatprep.subr.bf16.mxu0 0
        %507 = vmatpush1.bf16.msra.mxu0 0
        %508 = vmatprep.subr.bf16.mxu0 0
        %509 = vmatpush1.bf16.msra.mxu0 0
        %510 = vmatprep.subr.bf16.mxu0 0
        %511 = vmatpush1.bf16.msra.mxu0 0
        %512 = vmatprep.mubr.bf16.mxu0 0
        %513 = vmatmul.mubr.bf16.gmra.mrb[0].mxu0 %v478
        %v514 = vpop.f32.mrb[0].mxu0
        %v515 = vadd.f32 %v474, %v514
        %v516 = vpop.f32.mrb[0].mxu0
        %v517 = vpop.f32.mrb[0].mxu0
        %v518 = vpop.f32.mrb[0].mxu0
        %519 = vdwg.mxu0
        %v520 = vld [vmem:[#allocation8] sm:$0xff]
        %v521 = vld [vmem:[#allocation8 + $0x8] sm:$0xff]
        %v522 = vld [vmem:[#allocation8 + $0x10] sm:$0xff]
        %v523 = vld [vmem:[#allocation8 + $0x18] sm:$0xff]
        %v524 = vpack.c.bf16 %v521, %v520
        %v525 = vpack.c.bf16 %v523, %v522
        %v526 = vld [vmem:[%s5] sm:$0x1]
        %v528 = vlaneseq
        %v529 = vshrl.u32 %v528, 7
        %v530 = vsub.s32 0, %v529
        %v531 = vrot.slane %v526, %v530
        %v534 = vsel %vm476, %v462, 0
        %536 = vmatprep.subr.bf16.mxu0 0
        %537 = vmatpush1.bf16.msra.mxu0 %v524
        %538 = vmatprep.subr.bf16.mxu0 0
        %539 = vmatpush1.bf16.msra.mxu0 %v525
        %540 = vmatprep.subr.bf16.mxu0 0
        %541 = vmatpush1.bf16.msra.mxu0 0
        %542 = vmatprep.subr.bf16.mxu0 0
        %543 = vmatpush1.bf16.msra.mxu0 0
        %544 = vmatprep.subr.bf16.mxu0 0
        %545 = vmatpush1.bf16.msra.mxu0 0
        %546 = vmatprep.subr.bf16.mxu0 0
        %547 = vmatpush1.bf16.msra.mxu0 0
        %548 = vmatprep.subr.bf16.mxu0 0
        %549 = vmatpush1.bf16.msra.mxu0 0
        %550 = vmatprep.subr.bf16.mxu0 0
        %551 = vmatpush1.bf16.msra.mxu0 0
        %552 = vmatprep.subr.bf16.mxu0 0
        %553 = vmatpush1.bf16.msra.mxu0 0
        %554 = vmatprep.subr.bf16.mxu0 0
        %555 = vmatpush1.bf16.msra.mxu0 0
        %556 = vmatprep.subr.bf16.mxu0 0
        %557 = vmatpush1.bf16.msra.mxu0 0
        %558 = vmatprep.subr.bf16.mxu0 0
        %559 = vmatpush1.bf16.msra.mxu0 0
        %560 = vmatprep.subr.bf16.mxu0 0
        %561 = vmatpush1.bf16.msra.mxu0 0
        %562 = vmatprep.subr.bf16.mxu0 0
        %563 = vmatpush1.bf16.msra.mxu0 0
        %564 = vmatprep.subr.bf16.mxu0 0
        %565 = vmatpush1.bf16.msra.mxu0 0
        %566 = vmatprep.subr.bf16.mxu0 0
        %567 = vmatpush1.bf16.msra.mxu0 0
        %568 = vmatprep.mubr.bf16.mxu0 0
        %569 = vmatmul.mubr.bf16.gmra.mrb[0].mxu0 %v534
        %v570 = vpop.f32.mrb[0].mxu0
        %v571 = vadd.f32 %v531, %v570
        %v572 = vpop.f32.mrb[0].mxu0
        %v573 = vpop.f32.mrb[0].mxu0
        %v574 = vpop.f32.mrb[0].mxu0
        %575 = vdwg.mxu0
        %577 = vrot.lane.b32.xlu0 %v515, 120
        %v578 = vpop.permute.xlu0 %577
        %580 = vrot.lane.b32.xlu0 %v515, 112
        %v581 = vpop.permute.xlu0 %580
        %583 = vrot.lane.b32.xlu0 %v515, 104
        %v584 = vpop.permute.xlu0 %583
        %v586 = vcombine.low %v515, %v581
        %v587 = vcombine.high %v515, %v581
        %v589 = vunpack.c.l.s4 1983009808
        %v590 = vunpack.c.0.s8 %v589
        %v591 = vlaneseq
        %v592 = vshrl.u32 %v591, 7
        %v593 = vsub.s32 %v590, %v592
        %v594 = vrot.slane %v586, %v593
        %v596 = vunpack.c.l.s4 1983009808
        %v597 = vunpack.c.0.s8 %v596
        %v598 = vlaneseq
        %v599 = vshrl.u32 %v598, 7
        %v600 = vsub.s32 %v597, %v599
        %v601 = vrot.slane %v587, %v600
        %v602 = vcombine.low %v578, %v584
        %v603 = vcombine.high %v578, %v584
        %v605 = vunpack.c.l.s4 1983009808
        %v606 = vunpack.c.0.s8 %v605
        %v607 = vlaneseq
        %v608 = vshrl.u32 %v607, 7
        %v609 = vsub.s32 %v606, %v608
        %v610 = vrot.slane %v602, %v609
        %v612 = vunpack.c.l.s4 1983009808
        %v613 = vunpack.c.0.s8 %v612
        %v614 = vlaneseq
        %v615 = vshrl.u32 %v614, 7
        %v616 = vsub.s32 %v613, %v615
        %v617 = vrot.slane %v603, %v616
        %v618 = vcombine.low %v594, %v610
        %v619 = vcombine.high %v594, %v610
        %v621 = vunpack.c.l.s4 1934713408
        %v622 = vunpack.c.0.s8 %v621
        %v623 = vlaneseq
        %v624 = vshrl.u32 %v623, 7
        %v625 = vsub.s32 %v622, %v624
        %v626 = vrot.slane %v618, %v625
        %v628 = vunpack.c.l.s4 1934713408
        %v629 = vunpack.c.0.s8 %v628
        %v630 = vlaneseq
        %v631 = vshrl.u32 %v630, 7
        %v632 = vsub.s32 %v629, %v631
        %v633 = vrot.slane %v619, %v632
        %v634 = vcombine.low %v601, %v617
        %v635 = vcombine.high %v601, %v617
        %v637 = vunpack.c.l.s4 1934713408
        %v638 = vunpack.c.0.s8 %v637
        %v639 = vlaneseq
        %v640 = vshrl.u32 %v639, 7
        %v641 = vsub.s32 %v638, %v640
        %v642 = vrot.slane %v634, %v641
        %v644 = vunpack.c.l.s4 1934713408
        %v645 = vunpack.c.0.s8 %v644
        %v646 = vlaneseq
        %v647 = vshrl.u32 %v646, 7
        %v648 = vsub.s32 %v645, %v647
        %v649 = vrot.slane %v635, %v648
        %v650 = vcombine.high %v626, 0.0
        %v651 = vcombine.high %v633, 0.0
        %v652 = vcombine.high %v642, 0.0
        %v653 = vcombine.high %v649, 0.0
        %v654 = vcombine.low %v626, %v633
        %v656 = vunpack.c.l.s4 1983009808
        %v657 = vunpack.c.0.s8 %v656
        %v658 = vlaneseq
        %v659 = vshrl.u32 %v658, 7
        %v660 = vsub.s32 %v657, %v659
        %v661 = vrot.slane %v654, %v660
        %v662 = vcombine.low %v650, %v651
        %v664 = vunpack.c.l.s4 1983009808
        %v665 = vunpack.c.0.s8 %v664
        %v666 = vlaneseq
        %v667 = vshrl.u32 %v666, 7
        %v668 = vsub.s32 %v665, %v667
        %v669 = vrot.slane %v662, %v668
        %v670 = vcombine.low %v642, %v649
        %v672 = vunpack.c.l.s4 1983009808
        %v673 = vunpack.c.0.s8 %v672
        %v674 = vlaneseq
        %v675 = vshrl.u32 %v674, 7
        %v676 = vsub.s32 %v673, %v675
        %v677 = vrot.slane %v670, %v676
        %v678 = vcombine.low %v652, %v653
        %v680 = vunpack.c.l.s4 1983009808
        %v681 = vunpack.c.0.s8 %v680
        %v682 = vlaneseq
        %v683 = vshrl.u32 %v682, 7
        %v684 = vsub.s32 %v681, %v683
        %v685 = vrot.slane %v678, %v684
        %v686 = vcombine.low %v661, %v669
        %v687 = vcombine.high %v661, %v669
        %v689 = vunpack.c.l.s4 1934713408
        %v690 = vunpack.c.0.s8 %v689
        %v691 = vlaneseq
        %v692 = vshrl.u32 %v691, 7
        %v693 = vsub.s32 %v690, %v692
        %v694 = vrot.slane %v686, %v693
        %v696 = vunpack.c.l.s4 1934713408
        %v697 = vunpack.c.0.s8 %v696
        %v698 = vlaneseq
        %v699 = vshrl.u32 %v698, 7
        %v700 = vsub.s32 %v697, %v699
        %v701 = vrot.slane %v687, %v700
        %v702 = vcombine.low %v677, %v685
        %v703 = vcombine.high %v677, %v685
        %v705 = vunpack.c.l.s4 1934713408
        %v706 = vunpack.c.0.s8 %v705
        %v707 = vlaneseq
        %v708 = vshrl.u32 %v707, 7
        %v709 = vsub.s32 %v706, %v708
        %v710 = vrot.slane %v702, %v709
        %v712 = vunpack.c.l.s4 1934713408
        %v713 = vunpack.c.0.s8 %v712
        %v714 = vlaneseq
        %v715 = vshrl.u32 %v714, 7
        %v716 = vsub.s32 %v713, %v715
        %v717 = vrot.slane %v703, %v716
        %v718 = vcombine.low %v694, %v710
        %v719 = vcombine.high %v694, %v710
        %v720 = vcombine.low %v701, %v717
        %v721 = vcombine.high %v701, %v717
        %v722 = vpack.c.bf16 %v718, %v718
        %v723 = vpack.c.bf16 %v719, %v719
        %v724 = vpack.c.bf16 %v720, %v720
        %v725 = vpack.c.bf16 %v721, %v721
        %727 = vrot.lane.b32.xlu0 %v571, 120
        %v728 = vpop.permute.xlu0 %727
        %730 = vrot.lane.b32.xlu0 %v571, 112
        %v731 = vpop.permute.xlu0 %730
        %733 = vrot.lane.b32.xlu0 %v571, 104
        %v734 = vpop.permute.xlu0 %733
        %v736 = vcombine.low %v571, %v731
        %v737 = vcombine.high %v571, %v731
        %v739 = vunpack.c.l.s4 1983009808
        %v740 = vunpack.c.0.s8 %v739
        %v741 = vlaneseq
        %v742 = vshrl.u32 %v741, 7
        %v743 = vsub.s32 %v740, %v742
        %v744 = vrot.slane %v736, %v743
        %v746 = vunpack.c.l.s4 1983009808
        %v747 = vunpack.c.0.s8 %v746
        %v748 = vlaneseq
        %v749 = vshrl.u32 %v748, 7
        %v750 = vsub.s32 %v747, %v749
        %v751 = vrot.slane %v737, %v750
        %v752 = vcombine.low %v728, %v734
        %v753 = vcombine.high %v728, %v734
        %v755 = vunpack.c.l.s4 1983009808
        %v756 = vunpack.c.0.s8 %v755
        %v757 = vlaneseq
        %v758 = vshrl.u32 %v757, 7
        %v759 = vsub.s32 %v756, %v758
        %v760 = vrot.slane %v752, %v759
        %v762 = vunpack.c.l.s4 1983009808
        %v763 = vunpack.c.0.s8 %v762
        %v764 = vlaneseq
        %v765 = vshrl.u32 %v764, 7
        %v766 = vsub.s32 %v763, %v765
        %v767 = vrot.slane %v753, %v766
        %v768 = vcombine.low %v744, %v760
        %v769 = vcombine.high %v744, %v760
        %v771 = vunpack.c.l.s4 1934713408
        %v772 = vunpack.c.0.s8 %v771
        %v773 = vlaneseq
        %v774 = vshrl.u32 %v773, 7
        %v775 = vsub.s32 %v772, %v774
        %v776 = vrot.slane %v768, %v775
        %v778 = vunpack.c.l.s4 1934713408
        %v779 = vunpack.c.0.s8 %v778
        %v780 = vlaneseq
        %v781 = vshrl.u32 %v780, 7
        %v782 = vsub.s32 %v779, %v781
        %v783 = vrot.slane %v769, %v782
        %v784 = vcombine.low %v751, %v767
        %v785 = vcombine.high %v751, %v767
        %v787 = vunpack.c.l.s4 1934713408
        %v788 = vunpack.c.0.s8 %v787
        %v789 = vlaneseq
        %v790 = vshrl.u32 %v789, 7
        %v791 = vsub.s32 %v788, %v790
        %v792 = vrot.slane %v784, %v791
        %v794 = vunpack.c.l.s4 1934713408
        %v795 = vunpack.c.0.s8 %v794
        %v796 = vlaneseq
        %v797 = vshrl.u32 %v796, 7
        %v798 = vsub.s32 %v795, %v797
        %v799 = vrot.slane %v785, %v798
        %v800 = vcombine.high %v776, 0.0
        %v801 = vcombine.high %v783, 0.0
        %v802 = vcombine.high %v792, 0.0
        %v803 = vcombine.high %v799, 0.0
        %v804 = vcombine.low %v776, %v783
        %v806 = vunpack.c.l.s4 1983009808
        %v807 = vunpack.c.0.s8 %v806
        %v808 = vlaneseq
        %v809 = vshrl.u32 %v808, 7
        %v810 = vsub.s32 %v807, %v809
        %v811 = vrot.slane %v804, %v810
        %v812 = vcombine.low %v800, %v801
        %v814 = vunpack.c.l.s4 1983009808
        %v815 = vunpack.c.0.s8 %v814
        %v816 = vlaneseq
        %v817 = vshrl.u32 %v816, 7
        %v818 = vsub.s32 %v815, %v817
        %v819 = vrot.slane %v812, %v818
        %v820 = vcombine.low %v792, %v799
        %v822 = vunpack.c.l.s4 1983009808
        %v823 = vunpack.c.0.s8 %v822
        %v824 = vlaneseq
        %v825 = vshrl.u32 %v824, 7
        %v826 = vsub.s32 %v823, %v825
        %v827 = vrot.slane %v820, %v826
        %v828 = vcombine.low %v802, %v803
        %v830 = vunpack.c.l.s4 1983009808
        %v831 = vunpack.c.0.s8 %v830
        %v832 = vlaneseq
        %v833 = vshrl.u32 %v832, 7
        %v834 = vsub.s32 %v831, %v833
        %v835 = vrot.slane %v828, %v834
        %v836 = vcombine.low %v811, %v819
        %v837 = vcombine.high %v811, %v819
        %v839 = vunpack.c.l.s4 1934713408
        %v840 = vunpack.c.0.s8 %v839
        %v841 = vlaneseq
        %v842 = vshrl.u32 %v841, 7
        %v843 = vsub.s32 %v840, %v842
        %v844 = vrot.slane %v836, %v843
        %v846 = vunpack.c.l.s4 1934713408
        %v847 = vunpack.c.0.s8 %v846
        %v848 = vlaneseq
        %v849 = vshrl.u32 %v848, 7
        %v850 = vsub.s32 %v847, %v849
        %v851 = vrot.slane %v837, %v850
        %v852 = vcombine.low %v827, %v835
        %v853 = vcombine.high %v827, %v835
        %v855 = vunpack.c.l.s4 1934713408
        %v856 = vunpack.c.0.s8 %v855
        %v857 = vlaneseq
        %v858 = vshrl.u32 %v857, 7
        %v859 = vsub.s32 %v856, %v858
        %v860 = vrot.slane %v852, %v859
        %v862 = vunpack.c.l.s4 1934713408
        %v863 = vunpack.c.0.s8 %v862
        %v864 = vlaneseq
        %v865 = vshrl.u32 %v864, 7
        %v866 = vsub.s32 %v863, %v865
        %v867 = vrot.slane %v853, %v866
        %v868 = vcombine.low %v844, %v860
        %v869 = vcombine.high %v844, %v860
        %v870 = vcombine.low %v851, %v867
        %v871 = vcombine.high %v851, %v867
        %v872 = vpack.c.bf16 %v868, %v868
        %v873 = vpack.c.bf16 %v869, %v869
        %v874 = vpack.c.bf16 %v870, %v870
        %v875 = vpack.c.bf16 %v871, %v871
        %876 = vrot.lane.b32.xlu0 %v571, 96
        %v877 = vpop.permute.xlu0 %876
        %878 = vrot.lane.b32.xlu0 %v728, 96
        %v879 = vpop.permute.xlu0 %878
        %880 = vrot.lane.b32.xlu0 %v731, 96
        %v881 = vpop.permute.xlu0 %880
        %882 = vrot.lane.b32.xlu0 %v734, 96
        %v883 = vpop.permute.xlu0 %882
        %v888 = vcombine.low %v877, %v881
        %v889 = vcombine.high %v877, %v881
        %v891 = vunpack.c.l.s4 1983009808
        %v892 = vunpack.c.0.s8 %v891
        %v893 = vlaneseq
        %v894 = vshrl.u32 %v893, 7
        %v895 = vsub.s32 %v892, %v894
        %v896 = vrot.slane %v888, %v895
        %v898 = vunpack.c.l.s4 1983009808
        %v899 = vunpack.c.0.s8 %v898
        %v900 = vlaneseq
        %v901 = vshrl.u32 %v900, 7
        %v902 = vsub.s32 %v899, %v901
        %v903 = vrot.slane %v889, %v902
        %v904 = vcombine.low %v879, %v883
        %v905 = vcombine.high %v879, %v883
        %v907 = vunpack.c.l.s4 1983009808
        %v908 = vunpack.c.0.s8 %v907
        %v909 = vlaneseq
        %v910 = vshrl.u32 %v909, 7
        %v911 = vsub.s32 %v908, %v910
        %v912 = vrot.slane %v904, %v911
        %v914 = vunpack.c.l.s4 1983009808
        %v915 = vunpack.c.0.s8 %v914
        %v916 = vlaneseq
        %v917 = vshrl.u32 %v916, 7
        %v918 = vsub.s32 %v915, %v917
        %v919 = vrot.slane %v905, %v918
        %v920 = vcombine.low %v896, %v912
        %v921 = vcombine.high %v896, %v912
        %v923 = vunpack.c.l.s4 1934713408
        %v924 = vunpack.c.0.s8 %v923
        %v925 = vlaneseq
        %v926 = vshrl.u32 %v925, 7
        %v927 = vsub.s32 %v924, %v926
        %v928 = vrot.slane %v920, %v927
        %v930 = vunpack.c.l.s4 1934713408
        %v931 = vunpack.c.0.s8 %v930
        %v932 = vlaneseq
        %v933 = vshrl.u32 %v932, 7
        %v934 = vsub.s32 %v931, %v933
        %v935 = vrot.slane %v921, %v934
        %v936 = vcombine.low %v903, %v919
        %v937 = vcombine.high %v903, %v919
        %v939 = vunpack.c.l.s4 1934713408
        %v940 = vunpack.c.0.s8 %v939
        %v941 = vlaneseq
        %v942 = vshrl.u32 %v941, 7
        %v943 = vsub.s32 %v940, %v942
        %v944 = vrot.slane %v936, %v943
        %v946 = vunpack.c.l.s4 1934713408
        %v947 = vunpack.c.0.s8 %v946
        %v948 = vlaneseq
        %v949 = vshrl.u32 %v948, 7
        %v950 = vsub.s32 %v947, %v949
        %v951 = vrot.slane %v937, %v950
        %v952 = vcombine.high %v928, 0.0
        %v953 = vcombine.high %v935, 0.0
        %v954 = vcombine.high %v944, 0.0
        %v955 = vcombine.high %v951, 0.0
        %v956 = vcombine.low %v928, %v935
        %v958 = vunpack.c.l.s4 1983009808
        %v959 = vunpack.c.0.s8 %v958
        %v960 = vlaneseq
        %v961 = vshrl.u32 %v960, 7
        %v962 = vsub.s32 %v959, %v961
        %v963 = vrot.slane %v956, %v962
        %v964 = vcombine.low %v952, %v953
        %v966 = vunpack.c.l.s4 1983009808
        %v967 = vunpack.c.0.s8 %v966
        %v968 = vlaneseq
        %v969 = vshrl.u32 %v968, 7
        %v970 = vsub.s32 %v967, %v969
        %v971 = vrot.slane %v964, %v970
        %v972 = vcombine.low %v944, %v951
        %v974 = vunpack.c.l.s4 1983009808
        %v975 = vunpack.c.0.s8 %v974
        %v976 = vlaneseq
        %v977 = vshrl.u32 %v976, 7
        %v978 = vsub.s32 %v975, %v977
        %v979 = vrot.slane %v972, %v978
        %v980 = vcombine.low %v954, %v955
        %v982 = vunpack.c.l.s4 1983009808
        %v983 = vunpack.c.0.s8 %v982
        %v984 = vlaneseq
        %v985 = vshrl.u32 %v984, 7
        %v986 = vsub.s32 %v983, %v985
        %v987 = vrot.slane %v980, %v986
        %v988 = vcombine.low %v963, %v971
        %v989 = vcombine.high %v963, %v971
        %v991 = vunpack.c.l.s4 1934713408
        %v992 = vunpack.c.0.s8 %v991
        %v993 = vlaneseq
        %v994 = vshrl.u32 %v993, 7
        %v995 = vsub.s32 %v992, %v994
        %v996 = vrot.slane %v988, %v995
        %v998 = vunpack.c.l.s4 1934713408
        %v999 = vunpack.c.0.s8 %v998
        %v1000 = vlaneseq
        %v1001 = vshrl.u32 %v1000, 7
        %v1002 = vsub.s32 %v999, %v1001
        %v1003 = vrot.slane %v989, %v1002
        %v1004 = vcombine.low %v979, %v987
        %v1005 = vcombine.high %v979, %v987
        %v1007 = vunpack.c.l.s4 1934713408
        %v1008 = vunpack.c.0.s8 %v1007
        %v1009 = vlaneseq
        %v1010 = vshrl.u32 %v1009, 7
        %v1011 = vsub.s32 %v1008, %v1010
        %v1012 = vrot.slane %v1004, %v1011
        %v1014 = vunpack.c.l.s4 1934713408
        %v1015 = vunpack.c.0.s8 %v1014
        %v1016 = vlaneseq
        %v1017 = vshrl.u32 %v1016, 7
        %v1018 = vsub.s32 %v1015, %v1017
        %v1019 = vrot.slane %v1005, %v1018
        %v1020 = vcombine.low %v996, %v1012
        %v1021 = vcombine.high %v996, %v1012
        %v1022 = vcombine.low %v1003, %v1019
        %v1023 = vcombine.high %v1003, %v1019
        %v1024 = vpack.c.bf16 %v1020, %v1020
        %v1025 = vpack.c.bf16 %v1021, %v1021
        %v1026 = vpack.c.bf16 %v1022, %v1022
        %v1027 = vpack.c.bf16 %v1023, %v1023
        %vm1028 = vcmask 64512
        %v1030 = vsel %vm1028, %v722, 0
        %v1033 = vsel %vm1028, %v872, 0
        %1035 = vmatprep.subr.bf16.mxu0 0
        %1036 = vmatpush1.bf16.xpose.msra.mxu0 %v1033
        %1037 = vmatprep.subr.bf16.mxu0 0
        %1038 = vmatpush1.bf16.xpose.msra.mxu0 0
        %1039 = vmatprep.subr.bf16.mxu0 0
        %1040 = vmatpush1.bf16.xpose.msra.mxu0 0
        %1041 = vmatprep.subr.bf16.mxu0 0
        %1042 = vmatpush1.bf16.xpose.msra.mxu0 0
        %1043 = vmatprep.subr.bf16.mxu0 0
        %1044 = vmatpush1.bf16.xpose.msra.mxu0 0
        %1045 = vmatprep.subr.bf16.mxu0 0
        %1046 = vmatpush1.bf16.xpose.msra.mxu0 0
        %1047 = vmatprep.subr.bf16.mxu0 0
        %1048 = vmatpush1.bf16.xpose.msra.mxu0 0
        %1049 = vmatprep.subr.bf16.mxu0 0
        %1050 = vmatpush1.bf16.xpose.msra.mxu0 0
        %1051 = vmatprep.subr.bf16.mxu0 0
        %1052 = vmatpush1.bf16.xpose.msra.mxu0 0
        %1053 = vmatprep.subr.bf16.mxu0 0
        %1054 = vmatpush1.bf16.xpose.msra.mxu0 0
        %1055 = vmatprep.subr.bf16.mxu0 0
        %1056 = vmatpush1.bf16.xpose.msra.mxu0 0
        %1057 = vmatprep.subr.bf16.mxu0 0
        %1058 = vmatpush1.bf16.xpose.msra.mxu0 0
        %1059 = vmatprep.subr.bf16.mxu0 0
        %1060 = vmatpush1.bf16.xpose.msra.mxu0 0
        %1061 = vmatprep.subr.bf16.mxu0 0
        %1062 = vmatpush1.bf16.xpose.msra.mxu0 0
        %1063 = vmatprep.subr.bf16.mxu0 0
        %1064 = vmatpush1.bf16.xpose.msra.mxu0 0
        %1065 = vmatprep.subr.bf16.mxu0 0
        %1066 = vmatpush1.bf16.xpose.msra.mxu0 0
        %1067 = vmatprep.mubr.bf16.mxu0 0
        %1068 = vmatmul.mubr.bf16.gmra.mrb[0].mxu0 %v1030
        %v1069 = vpop.f32.mrb[0].mxu0
        %v1070 = vadd.f32 0.0, %v1069
        %v1071 = vpop.f32.mrb[0].mxu0
        %v1072 = vpop.f32.mrb[0].mxu0
        %v1073 = vpop.f32.mrb[0].mxu0
        %1074 = vdwg.mxu0
        %v1076 = vsel %vm1028, %v723, 0
        %v1079 = vsel %vm1028, %v873, 0
        %1081 = vmatprep.subr.bf16.mxu0 0
        %1082 = vmatpush1.bf16.xpose.msra.mxu0 %v1079
        %1083 = vmatprep.subr.bf16.mxu0 0
        %1084 = vmatpush1.bf16.xpose.msra.mxu0 0
        %1085 = vmatprep.subr.bf16.mxu0 0
        %1086 = vmatpush1.bf16.xpose.msra.mxu0 0
        %1087 = vmatprep.subr.bf16.mxu0 0
        %1088 = vmatpush1.bf16.xpose.msra.mxu0 0
        %1089 = vmatprep.subr.bf16.mxu0 0
        %1090 = vmatpush1.bf16.xpose.msra.mxu0 0
        %1091 = vmatprep.subr.bf16.mxu0 0
        %1092 = vmatpush1.bf16.xpose.msra.mxu0 0
        %1093 = vmatprep.subr.bf16.mxu0 0
        %1094 = vmatpush1.bf16.xpose.msra.mxu0 0
        %1095 = vmatprep.subr.bf16.mxu0 0
        %1096 = vmatpush1.bf16.xpose.msra.mxu0 0
        %1097 = vmatprep.subr.bf16.mxu0 0
        %1098 = vmatpush1.bf16.xpose.msra.mxu0 0
        %1099 = vmatprep.subr.bf16.mxu0 0
        %1100 = vmatpush1.bf16.xpose.msra.mxu0 0
        %1101 = vmatprep.subr.bf16.mxu0 0
        %1102 = vmatpush1.bf16.xpose.msra.mxu0 0
        %1103 = vmatprep.subr.bf16.mxu0 0
        %1104 = vmatpush1.bf16.xpose.msra.mxu0 0
        %1105 = vmatprep.subr.bf16.mxu0 0
        %1106 = vmatpush1.bf16.xpose.msra.mxu0 0
        %1107 = vmatprep.subr.bf16.mxu0 0
        %1108 = vmatpush1.bf16.xpose.msra.mxu0 0
        %1109 = vmatprep.subr.bf16.mxu0 0
        %1110 = vmatpush1.bf16.xpose.msra.mxu0 0
        %1111 = vmatprep.subr.bf16.mxu0 0
        %1112 = vmatpush1.bf16.xpose.msra.mxu0 0
        %1113 = vmatprep.mubr.bf16.mxu0 0
        %1114 = vmatmul.mubr.bf16.gmra.mrb[0].mxu0 %v1076
        %v1115 = vpop.f32.mrb[0].mxu0
        %v1116 = vadd.f32 0.0, %v1115
        %v1117 = vpop.f32.mrb[0].mxu0
        %v1118 = vpop.f32.mrb[0].mxu0
        %v1119 = vpop.f32.mrb[0].mxu0
        %1120 = vdwg.mxu0
        %v1122 = vsel %vm1028, %v724, 0
        %v1125 = vsel %vm1028, %v874, 0
        %1127 = vmatprep.subr.bf16.mxu0 0
        %1128 = vmatpush1.bf16.xpose.msra.mxu0 %v1125
        %1129 = vmatprep.subr.bf16.mxu0 0
        %1130 = vmatpush1.bf16.xpose.msra.mxu0 0
        %1131 = vmatprep.subr.bf16.mxu0 0
        %1132 = vmatpush1.bf16.xpose.msra.mxu0 0
        %1133 = vmatprep.subr.bf16.mxu0 0
        %1134 = vmatpush1.bf16.xpose.msra.mxu0 0
        %1135 = vmatprep.subr.bf16.mxu0 0
        %1136 = vmatpush1.bf16.xpose.msra.mxu0 0
        %1137 = vmatprep.subr.bf16.mxu0 0
        %1138 = vmatpush1.bf16.xpose.msra.mxu0 0
        %1139 = vmatprep.subr.bf16.mxu0 0
        %1140 = vmatpush1.bf16.xpose.msra.mxu0 0
        %1141 = vmatprep.subr.bf16.mxu0 0
        %1142 = vmatpush1.bf16.xpose.msra.mxu0 0
        %1143 = vmatprep.subr.bf16.mxu0 0
        %1144 = vmatpush1.bf16.xpose.msra.mxu0 0
        %1145 = vmatprep.subr.bf16.mxu0 0
        %1146 = vmatpush1.bf16.xpose.msra.mxu0 0
        %1147 = vmatprep.subr.bf16.mxu0 0
        %1148 = vmatpush1.bf16.xpose.msra.mxu0 0
        %1149 = vmatprep.subr.bf16.mxu0 0
        %1150 = vmatpush1.bf16.xpose.msra.mxu0 0
        %1151 = vmatprep.subr.bf16.mxu0 0
        %1152 = vmatpush1.bf16.xpose.msra.mxu0 0
        %1153 = vmatprep.subr.bf16.mxu0 0
        %1154 = vmatpush1.bf16.xpose.msra.mxu0 0
        %1155 = vmatprep.subr.bf16.mxu0 0
        %1156 = vmatpush1.bf16.xpose.msra.mxu0 0
        %1157 = vmatprep.subr.bf16.mxu0 0
        %1158 = vmatpush1.bf16.xpose.msra.mxu0 0
        %1159 = vmatprep.mubr.bf16.mxu0 0
        %1160 = vmatmul.mubr.bf16.gmra.mrb[0].mxu0 %v1122
        %v1161 = vpop.f32.mrb[0].mxu0
        %v1162 = vadd.f32 0.0, %v1161
        %v1163 = vpop.f32.mrb[0].mxu0
        %v1164 = vpop.f32.mrb[0].mxu0
        %v1165 = vpop.f32.mrb[0].mxu0
        %1166 = vdwg.mxu0
        %v1168 = vsel %vm1028, %v725, 0
        %v1171 = vsel %vm1028, %v875, 0
        %1173 = vmatprep.subr.bf16.mxu0 0
        %1174 = vmatpush1.bf16.xpose.msra.mxu0 %v1171
        %1175 = vmatprep.subr.bf16.mxu0 0
        %1176 = vmatpush1.bf16.xpose.msra.mxu0 0
        %1177 = vmatprep.subr.bf16.mxu0 0
        %1178 = vmatpush1.bf16.xpose.msra.mxu0 0
        %1179 = vmatprep.subr.bf16.mxu0 0
        %1180 = vmatpush1.bf16.xpose.msra.mxu0 0
        %1181 = vmatprep.subr.bf16.mxu0 0
        %1182 = vmatpush1.bf16.xpose.msra.mxu0 0
        %1183 = vmatprep.subr.bf16.mxu0 0
        %1184 = vmatpush1.bf16.xpose.msra.mxu0 0
        %1185 = vmatprep.subr.bf16.mxu0 0
        %1186 = vmatpush1.bf16.xpose.msra.mxu0 0
        %1187 = vmatprep.subr.bf16.mxu0 0
        %1188 = vmatpush1.bf16.xpose.msra.mxu0 0
        %1189 = vmatprep.subr.bf16.mxu0 0
        %1190 = vmatpush1.bf16.xpose.msra.mxu0 0
        %1191 = vmatprep.subr.bf16.mxu0 0
        %1192 = vmatpush1.bf16.xpose.msra.mxu0 0
        %1193 = vmatprep.subr.bf16.mxu0 0
        %1194 = vmatpush1.bf16.xpose.msra.mxu0 0
        %1195 = vmatprep.subr.bf16.mxu0 0
        %1196 = vmatpush1.bf16.xpose.msra.mxu0 0
        %1197 = vmatprep.subr.bf16.mxu0 0
        %1198 = vmatpush1.bf16.xpose.msra.mxu0 0
        %1199 = vmatprep.subr.bf16.mxu0 0
        %1200 = vmatpush1.bf16.xpose.msra.mxu0 0
        %1201 = vmatprep.subr.bf16.mxu0 0
        %1202 = vmatpush1.bf16.xpose.msra.mxu0 0
        %1203 = vmatprep.subr.bf16.mxu0 0
        %1204 = vmatpush1.bf16.xpose.msra.mxu0 0
        %1205 = vmatprep.mubr.bf16.mxu0 0
        %1206 = vmatmul.mubr.bf16.gmra.mrb[0].mxu0 %v1168
        %v1207 = vpop.f32.mrb[0].mxu0
        %v1208 = vadd.f32 0.0, %v1207
        %v1209 = vpop.f32.mrb[0].mxu0
        %v1210 = vpop.f32.mrb[0].mxu0
        %v1211 = vpop.f32.mrb[0].mxu0
        %1212 = vdwg.mxu0
        %v1213 = vmul.f32 %v1070, 0.35355338
        %v1214 = vmul.f32 %v1116, 0.35355338
        %v1215 = vmul.f32 %v1162, 0.35355338
        %v1216 = vmul.f32 %v1208, 0.35355338
        %v1217 = vsel %vm1028, %v1213, -inf
        %1218 = vmax.xlane.f32.xlu0 %v1217
        %v1219 = vpop.xlane.xlu0 %1218
        %v1220 = vsel %vm1028, %v1214, -inf
        %1221 = vmax.xlane.f32.xlu0 %v1220
        %v1222 = vpop.xlane.xlu0 %1221
        %v1223 = vsel %vm1028, %v1215, -inf
        %1224 = vmax.xlane.f32.xlu0 %v1223
        %v1225 = vpop.xlane.xlu0 %1224
        %v1226 = vsel %vm1028, %v1216, -inf
        %1227 = vmax.xlane.f32.xlu0 %v1226
        %v1228 = vpop.xlane.xlu0 %1227
        %v1229 = vsub.f32 %v1213, %v1219
        %v1230 = vsub.f32 %v1214, %v1222
        %v1231 = vsub.f32 %v1215, %v1225
        %v1232 = vsub.f32 %v1216, %v1228
        %v1233 = vmul.f32 %v1229, 1.442695
        %v1234 = vpow.pop %v1233
        %v1235 = vmul.f32 %v1230, 1.442695
        %v1236 = vpow.pop %v1235
        %v1237 = vmul.f32 %v1231, 1.442695
        %v1238 = vpow.pop %v1237
        %v1239 = vmul.f32 %v1232, 1.442695
        %v1240 = vpow.pop %v1239
        %v1241 = vsel %vm1028, %v1234, 0.0
        %1242 = vadd.xlane.f32.xlu0 %v1241
        %v1243 = vpop.xlane.xlu0 %1242
        %v1244 = vsel %vm1028, %v1236, 0.0
        %1245 = vadd.xlane.f32.xlu0 %v1244
        %v1246 = vpop.xlane.xlu0 %1245
        %v1247 = vsel %vm1028, %v1238, 0.0
        %1248 = vadd.xlane.f32.xlu0 %v1247
        %v1249 = vpop.xlane.xlu0 %1248
        %v1250 = vsel %vm1028, %v1240, 0.0
        %1251 = vadd.xlane.f32.xlu0 %v1250
        %v1252 = vpop.xlane.xlu0 %1251
        %v1253 = vrcp.pop %v1243
        %v1254 = vrcp.pop %v1246
        %v1255 = vrcp.pop %v1249
        %v1256 = vrcp.pop %v1252
        %v1257 = vmul.f32 %v1234, %v1253
        %v1258 = vmul.f32 %v1236, %v1254
        %v1259 = vmul.f32 %v1238, %v1255
        %v1260 = vmul.f32 %v1240, %v1256
        %1261 = vst.msk [vmem:[%s457] sm:$0xff] %vm1028, %v1257
        %1262 = vst.msk [vmem:[%s457 + $0x8] sm:$0xff] %vm1028, %v1258
        %1263 = vst.msk [vmem:[%s457 + $0x10] sm:$0xff] %vm1028, %v1259
        %1264 = vst.msk [vmem:[%s457 + $0x18] sm:$0xff] %vm1028, %v1260
        %v1265 = vpack.c.bf16 %v1257, %v1257
        %v1266 = vpack.c.bf16 %v1258, %v1258
        %v1267 = vpack.c.bf16 %v1259, %v1259
        %v1268 = vpack.c.bf16 %v1260, %v1260
        %v1270 = vsel %vm1028, %v1265, 0
        %vm1272 = vcmask 1043456
        %v1274 = vsel %vm1272, %v1024, 0
        %1276 = vmatprep.subr.bf16.mxu0 0
        %1277 = vmatpush1.bf16.msra.mxu0 %v1274
        %1278 = vmatprep.subr.bf16.mxu0 0
        %1279 = vmatpush1.bf16.msra.mxu0 0
        %1280 = vmatprep.subr.bf16.mxu0 0
        %1281 = vmatpush1.bf16.msra.mxu0 0
        %1282 = vmatprep.subr.bf16.mxu0 0
        %1283 = vmatpush1.bf16.msra.mxu0 0
        %1284 = vmatprep.subr.bf16.mxu0 0
        %1285 = vmatpush1.bf16.msra.mxu0 0
        %1286 = vmatprep.subr.bf16.mxu0 0
        %1287 = vmatpush1.bf16.msra.mxu0 0
        %1288 = vmatprep.subr.bf16.mxu0 0
        %1289 = vmatpush1.bf16.msra.mxu0 0
        %1290 = vmatprep.subr.bf16.mxu0 0
        %1291 = vmatpush1.bf16.msra.mxu0 0
        %1292 = vmatprep.subr.bf16.mxu0 0
        %1293 = vmatpush1.bf16.msra.mxu0 0
        %1294 = vmatprep.subr.bf16.mxu0 0
        %1295 = vmatpush1.bf16.msra.mxu0 0
        %1296 = vmatprep.subr.bf16.mxu0 0
        %1297 = vmatpush1.bf16.msra.mxu0 0
        %1298 = vmatprep.subr.bf16.mxu0 0
        %1299 = vmatpush1.bf16.msra.mxu0 0
        %1300 = vmatprep.subr.bf16.mxu0 0
        %1301 = vmatpush1.bf16.msra.mxu0 0
        %1302 = vmatprep.subr.bf16.mxu0 0
        %1303 = vmatpush1.bf16.msra.mxu0 0
        %1304 = vmatprep.subr.bf16.mxu0 0
        %1305 = vmatpush1.bf16.msra.mxu0 0
        %1306 = vmatprep.subr.bf16.mxu0 0
        %1307 = vmatpush1.bf16.msra.mxu0 0
        %1308 = vmatprep.mubr.bf16.mxu0 0
        %1309 = vmatmul.mubr.bf16.gmra.mrb[0].mxu0 %v1270
        %v1310 = vpop.f32.mrb[0].mxu0
        %v1311 = vadd.f32 0.0, %v1310
        %v1312 = vpop.f32.mrb[0].mxu0
        %v1313 = vpop.f32.mrb[0].mxu0
        %v1314 = vpop.f32.mrb[0].mxu0
        %1315 = vdwg.mxu0
        %v1317 = vsel %vm1028, %v1266, 0
        %v1320 = vsel %vm1272, %v1025, 0
        %1322 = vmatprep.subr.bf16.mxu0 0
        %1323 = vmatpush1.bf16.msra.mxu0 %v1320
        %1324 = vmatprep.subr.bf16.mxu0 0
        %1325 = vmatpush1.bf16.msra.mxu0 0
        %1326 = vmatprep.subr.bf16.mxu0 0
        %1327 = vmatpush1.bf16.msra.mxu0 0
        %1328 = vmatprep.subr.bf16.mxu0 0
        %1329 = vmatpush1.bf16.msra.mxu0 0
        %1330 = vmatprep.subr.bf16.mxu0 0
        %1331 = vmatpush1.bf16.msra.mxu0 0
        %1332 = vmatprep.subr.bf16.mxu0 0
        %1333 = vmatpush1.bf16.msra.mxu0 0
        %1334 = vmatprep.subr.bf16.mxu0 0
        %1335 = vmatpush1.bf16.msra.mxu0 0
        %1336 = vmatprep.subr.bf16.mxu0 0
        %1337 = vmatpush1.bf16.msra.mxu0 0
        %1338 = vmatprep.subr.bf16.mxu0 0
        %1339 = vmatpush1.bf16.msra.mxu0 0
        %1340 = vmatprep.subr.bf16.mxu0 0
        %1341 = vmatpush1.bf16.msra.mxu0 0
        %1342 = vmatprep.subr.bf16.mxu0 0
        %1343 = vmatpush1.bf16.msra.mxu0 0
        %1344 = vmatprep.subr.bf16.mxu0 0
        %1345 = vmatpush1.bf16.msra.mxu0 0
        %1346 = vmatprep.subr.bf16.mxu0 0
        %1347 = vmatpush1.bf16.msra.mxu0 0
        %1348 = vmatprep.subr.bf16.mxu0 0
        %1349 = vmatpush1.bf16.msra.mxu0 0
        %1350 = vmatprep.subr.bf16.mxu0 0
        %1351 = vmatpush1.bf16.msra.mxu0 0
        %1352 = vmatprep.subr.bf16.mxu0 0
        %1353 = vmatpush1.bf16.msra.mxu0 0
        %1354 = vmatprep.mubr.bf16.mxu0 0
        %1355 = vmatmul.mubr.bf16.gmra.mrb[0].mxu0 %v1317
        %v1356 = vpop.f32.mrb[0].mxu0
        %v1357 = vadd.f32 0.0, %v1356
        %v1358 = vpop.f32.mrb[0].mxu0
        %v1359 = vpop.f32.mrb[0].mxu0
        %v1360 = vpop.f32.mrb[0].mxu0
        %1361 = vdwg.mxu0
        %v1363 = vsel %vm1028, %v1267, 0
        %v1366 = vsel %vm1272, %v1026, 0
        %1368 = vmatprep.subr.bf16.mxu0 0
        %1369 = vmatpush1.bf16.msra.mxu0 %v1366
        %1370 = vmatprep.subr.bf16.mxu0 0
        %1371 = vmatpush1.bf16.msra.mxu0 0
        %1372 = vmatprep.subr.bf16.mxu0 0
        %1373 = vmatpush1.bf16.msra.mxu0 0
        %1374 = vmatprep.subr.bf16.mxu0 0
        %1375 = vmatpush1.bf16.msra.mxu0 0
        %1376 = vmatprep.subr.bf16.mxu0 0
        %1377 = vmatpush1.bf16.msra.mxu0 0
        %1378 = vmatprep.subr.bf16.mxu0 0
        %1379 = vmatpush1.bf16.msra.mxu0 0
        %1380 = vmatprep.subr.bf16.mxu0 0
        %1381 = vmatpush1.bf16.msra.mxu0 0
        %1382 = vmatprep.subr.bf16.mxu0 0
        %1383 = vmatpush1.bf16.msra.mxu0 0
        %1384 = vmatprep.subr.bf16.mxu0 0
        %1385 = vmatpush1.bf16.msra.mxu0 0
        %1386 = vmatprep.subr.bf16.mxu0 0
        %1387 = vmatpush1.bf16.msra.mxu0 0
        %1388 = vmatprep.subr.bf16.mxu0 0
        %1389 = vmatpush1.bf16.msra.mxu0 0
        %1390 = vmatprep.subr.bf16.mxu0 0
        %1391 = vmatpush1.bf16.msra.mxu0 0
        %1392 = vmatprep.subr.bf16.mxu0 0
        %1393 = vmatpush1.bf16.msra.mxu0 0
        %1394 = vmatprep.subr.bf16.mxu0 0
        %1395 = vmatpush1.bf16.msra.mxu0 0
        %1396 = vmatprep.subr.bf16.mxu0 0
        %1397 = vmatpush1.bf16.msra.mxu0 0
        %1398 = vmatprep.subr.bf16.mxu0 0
        %1399 = vmatpush1.bf16.msra.mxu0 0
        %1400 = vmatprep.mubr.bf16.mxu0 0
        %1401 = vmatmul.mubr.bf16.gmra.mrb[0].mxu0 %v1363
        %v1402 = vpop.f32.mrb[0].mxu0
        %v1403 = vadd.f32 0.0, %v1402
        %v1404 = vpop.f32.mrb[0].mxu0
        %v1405 = vpop.f32.mrb[0].mxu0
        %v1406 = vpop.f32.mrb[0].mxu0
        %1407 = vdwg.mxu0
        %v1409 = vsel %vm1028, %v1268, 0
        %v1412 = vsel %vm1272, %v1027, 0
        %1414 = vmatprep.subr.bf16.mxu0 0
        %1415 = vmatpush1.bf16.msra.mxu0 %v1412
        %1416 = vmatprep.subr.bf16.mxu0 0
        %1417 = vmatpush1.bf16.msra.mxu0 0
        %1418 = vmatprep.subr.bf16.mxu0 0
        %1419 = vmatpush1.bf16.msra.mxu0 0
        %1420 = vmatprep.subr.bf16.mxu0 0
        %1421 = vmatpush1.bf16.msra.mxu0 0
        %1422 = vmatprep.subr.bf16.mxu0 0
        %1423 = vmatpush1.bf16.msra.mxu0 0
        %1424 = vmatprep.subr.bf16.mxu0 0
        %1425 = vmatpush1.bf16.msra.mxu0 0
        %1426 = vmatprep.subr.bf16.mxu0 0
        %1427 = vmatpush1.bf16.msra.mxu0 0
        %1428 = vmatprep.subr.bf16.mxu0 0
        %1429 = vmatpush1.bf16.msra.mxu0 0
        %1430 = vmatprep.subr.bf16.mxu0 0
        %1431 = vmatpush1.bf16.msra.mxu0 0
        %1432 = vmatprep.subr.bf16.mxu0 0
        %1433 = vmatpush1.bf16.msra.mxu0 0
        %1434 = vmatprep.subr.bf16.mxu0 0
        %1435 = vmatpush1.bf16.msra.mxu0 0
        %1436 = vmatprep.subr.bf16.mxu0 0
        %1437 = vmatpush1.bf16.msra.mxu0 0
        %1438 = vmatprep.subr.bf16.mxu0 0
        %1439 = vmatpush1.bf16.msra.mxu0 0
        %1440 = vmatprep.subr.bf16.mxu0 0
        %1441 = vmatpush1.bf16.msra.mxu0 0
        %1442 = vmatprep.subr.bf16.mxu0 0
        %1443 = vmatpush1.bf16.msra.mxu0 0
        %1444 = vmatprep.subr.bf16.mxu0 0
        %1445 = vmatpush1.bf16.msra.mxu0 0
        %1446 = vmatprep.mubr.bf16.mxu0 0
        %1447 = vmatmul.mubr.bf16.gmra.mrb[0].mxu0 %v1409
        %v1448 = vpop.f32.mrb[0].mxu0
        %v1449 = vadd.f32 0.0, %v1448
        %v1450 = vpop.f32.mrb[0].mxu0
        %v1451 = vpop.f32.mrb[0].mxu0
        %v1452 = vpop.f32.mrb[0].mxu0
        %1453 = vdwg.mxu0
        %v1454 = vcombine.low %v1311, %v1403
        %v1455 = vcombine.high %v1311, %v1403
        %v1457 = vunpack.c.l.s4 1983009808
        %v1458 = vunpack.c.0.s8 %v1457
        %v1459 = vlaneseq
        %v1460 = vshrl.u32 %v1459, 7
        %v1461 = vsub.s32 %v1458, %v1460
        %v1462 = vrot.slane %v1454, %v1461
        %v1464 = vunpack.c.l.s4 1983009808
        %v1465 = vunpack.c.0.s8 %v1464
        %v1466 = vlaneseq
        %v1467 = vshrl.u32 %v1466, 7
        %v1468 = vsub.s32 %v1465, %v1467
        %v1469 = vrot.slane %v1455, %v1468
        %v1470 = vcombine.low %v1357, %v1449
        %v1471 = vcombine.high %v1357, %v1449
        %v1473 = vunpack.c.l.s4 1983009808
        %v1474 = vunpack.c.0.s8 %v1473
        %v1475 = vlaneseq
        %v1476 = vshrl.u32 %v1475, 7
        %v1477 = vsub.s32 %v1474, %v1476
        %v1478 = vrot.slane %v1470, %v1477
        %v1480 = vunpack.c.l.s4 1983009808
        %v1481 = vunpack.c.0.s8 %v1480
        %v1482 = vlaneseq
        %v1483 = vshrl.u32 %v1482, 7
        %v1484 = vsub.s32 %v1481, %v1483
        %v1485 = vrot.slane %v1471, %v1484
        %v1486 = vcombine.low %v1462, %v1478
        %v1487 = vcombine.high %v1462, %v1478
        %v1489 = vunpack.c.l.s4 1934713408
        %v1490 = vunpack.c.0.s8 %v1489
        %v1491 = vlaneseq
        %v1492 = vshrl.u32 %v1491, 7
        %v1493 = vsub.s32 %v1490, %v1492
        %v1494 = vrot.slane %v1486, %v1493
        %v1496 = vunpack.c.l.s4 1934713408
        %v1497 = vunpack.c.0.s8 %v1496
        %v1498 = vlaneseq
        %v1499 = vshrl.u32 %v1498, 7
        %v1500 = vsub.s32 %v1497, %v1499
        %v1501 = vrot.slane %v1487, %v1500
        %v1502 = vcombine.low %v1469, %v1485
        %v1503 = vcombine.high %v1469, %v1485
        %v1505 = vunpack.c.l.s4 1934713408
        %v1506 = vunpack.c.0.s8 %v1505
        %v1507 = vlaneseq
        %v1508 = vshrl.u32 %v1507, 7
        %v1509 = vsub.s32 %v1506, %v1508
        %v1510 = vrot.slane %v1502, %v1509
        %v1512 = vunpack.c.l.s4 1934713408
        %v1513 = vunpack.c.0.s8 %v1512
        %v1514 = vlaneseq
        %v1515 = vshrl.u32 %v1514, 7
        %v1516 = vsub.s32 %v1513, %v1515
        %v1517 = vrot.slane %v1503, %v1516
        %v1518 = vcombine.high %v1494, 0.0
        %v1519 = vcombine.high %v1501, 0.0
        %v1520 = vcombine.high %v1510, 0.0
        %v1521 = vcombine.high %v1517, 0.0
        %v1522 = vcombine.low %v1494, %v1501
        %v1524 = vunpack.c.l.s4 1983009808
        %v1525 = vunpack.c.0.s8 %v1524
        %v1526 = vlaneseq
        %v1527 = vshrl.u32 %v1526, 7
        %v1528 = vsub.s32 %v1525, %v1527
        %v1529 = vrot.slane %v1522, %v1528
        %v1530 = vcombine.low %v1518, %v1519
        %v1532 = vunpack.c.l.s4 1983009808
        %v1533 = vunpack.c.0.s8 %v1532
        %v1534 = vlaneseq
        %v1535 = vshrl.u32 %v1534, 7
        %v1536 = vsub.s32 %v1533, %v1535
        %v1537 = vrot.slane %v1530, %v1536
        %v1538 = vcombine.low %v1510, %v1517
        %v1540 = vunpack.c.l.s4 1983009808
        %v1541 = vunpack.c.0.s8 %v1540
        %v1542 = vlaneseq
        %v1543 = vshrl.u32 %v1542, 7
        %v1544 = vsub.s32 %v1541, %v1543
        %v1545 = vrot.slane %v1538, %v1544
        %v1546 = vcombine.low %v1520, %v1521
        %v1548 = vunpack.c.l.s4 1983009808
        %v1549 = vunpack.c.0.s8 %v1548
        %v1550 = vlaneseq
        %v1551 = vshrl.u32 %v1550, 7
        %v1552 = vsub.s32 %v1549, %v1551
        %v1553 = vrot.slane %v1546, %v1552
        %v1554 = vcombine.low %v1529, %v1537
        %v1555 = vcombine.high %v1529, %v1537
        %v1557 = vunpack.c.l.s4 1934713408
        %v1558 = vunpack.c.0.s8 %v1557
        %v1559 = vlaneseq
        %v1560 = vshrl.u32 %v1559, 7
        %v1561 = vsub.s32 %v1558, %v1560
        %v1562 = vrot.slane %v1554, %v1561
        %v1564 = vunpack.c.l.s4 1934713408
        %v1565 = vunpack.c.0.s8 %v1564
        %v1566 = vlaneseq
        %v1567 = vshrl.u32 %v1566, 7
        %v1568 = vsub.s32 %v1565, %v1567
        %v1569 = vrot.slane %v1555, %v1568
        %v1570 = vcombine.low %v1545, %v1553
        %v1571 = vcombine.high %v1545, %v1553
        %v1573 = vunpack.c.l.s4 1934713408
        %v1574 = vunpack.c.0.s8 %v1573
        %v1575 = vlaneseq
        %v1576 = vshrl.u32 %v1575, 7
        %v1577 = vsub.s32 %v1574, %v1576
        %v1578 = vrot.slane %v1570, %v1577
        %v1580 = vunpack.c.l.s4 1934713408
        %v1581 = vunpack.c.0.s8 %v1580
        %v1582 = vlaneseq
        %v1583 = vshrl.u32 %v1582, 7
        %v1584 = vsub.s32 %v1581, %v1583
        %v1585 = vrot.slane %v1571, %v1584
        %v1586 = vcombine.low %v1562, %v1578
        %v1587 = vcombine.high %v1562, %v1578
        %v1588 = vcombine.low %v1569, %v1585
        %v1589 = vcombine.high %v1569, %v1585
        %1591 = vrot.lane.b32.xlu0 %v1587, 8
        %v1592 = vpop.permute.xlu0 %1591
        %1595 = vrot.lane.b32.xlu0 %v1588, 16
        %v1596 = vpop.permute.xlu0 %1595
        %1599 = vrot.lane.b32.xlu0 %v1589, 24
        %v1600 = vpop.permute.xlu0 %1599
        %v1602 = vsel %vm1028, %v1586, %v1592
        %vm1603 = vcmask 130048
        %v1604 = vsel %vm1603, %v1602, %v1596
        %vm1605 = vcmask 195584
        %v1606 = vsel %vm1605, %v1604, %v1600
        %v1607 = vpack.c.bf16 %v1606, %v1606
        %v1608 = vld [vmem:[#allocation10] sm:$0xff]
        %v1609 = vld [vmem:[#allocation10 + $0x8] sm:$0xff]
        %v1610 = vld [vmem:[#allocation10 + $0x10] sm:$0xff]
        %v1611 = vld [vmem:[#allocation10 + $0x18] sm:$0xff]
        %v1612 = vpack.c.bf16 %v1609, %v1608
        %v1613 = vpack.c.bf16 %v1611, %v1610
        %v1614 = vld [vmem:[%s7] sm:$0x1]
        %v1616 = vlaneseq
        %v1617 = vshrl.u32 %v1616, 7
        %v1618 = vsub.s32 0, %v1617
        %v1619 = vrot.slane %v1614, %v1618
        %v1622 = vsel %vm476, %v1607, 0
        %1624 = vmatprep.subr.bf16.mxu0 0
        %1625 = vmatpush1.bf16.msra.mxu0 %v1612
        %1626 = vmatprep.subr.bf16.mxu0 0
        %1627 = vmatpush1.bf16.msra.mxu0 %v1613
        %1628 = vmatprep.subr.bf16.mxu0 0
        %1629 = vmatpush1.bf16.msra.mxu0 0
        %1630 = vmatprep.subr.bf16.mxu0 0
        %1631 = vmatpush1.bf16.msra.mxu0 0
        %1632 = vmatprep.subr.bf16.mxu0 0
        %1633 = vmatpush1.bf16.msra.mxu0 0
        %1634 = vmatprep.subr.bf16.mxu0 0
        %1635 = vmatpush1.bf16.msra.mxu0 0
        %1636 = vmatprep.subr.bf16.mxu0 0
        %1637 = vmatpush1.bf16.msra.mxu0 0
        %1638 = vmatprep.subr.bf16.mxu0 0
        %1639 = vmatpush1.bf16.msra.mxu0 0
        %1640 = vmatprep.subr.bf16.mxu0 0
        %1641 = vmatpush1.bf16.msra.mxu0 0
        %1642 = vmatprep.subr.bf16.mxu0 0
        %1643 = vmatpush1.bf16.msra.mxu0 0
        %1644 = vmatprep.subr.bf16.mxu0 0
        %1645 = vmatpush1.bf16.msra.mxu0 0
        %1646 = vmatprep.subr.bf16.mxu0 0
        %1647 = vmatpush1.bf16.msra.mxu0 0
        %1648 = vmatprep.subr.bf16.mxu0 0
        %1649 = vmatpush1.bf16.msra.mxu0 0
        %1650 = vmatprep.subr.bf16.mxu0 0
        %1651 = vmatpush1.bf16.msra.mxu0 0
        %1652 = vmatprep.subr.bf16.mxu0 0
        %1653 = vmatpush1.bf16.msra.mxu0 0
        %1654 = vmatprep.subr.bf16.mxu0 0
        %1655 = vmatpush1.bf16.msra.mxu0 0
        %1656 = vmatprep.mubr.bf16.mxu0 0
        %1657 = vmatmul.mubr.bf16.gmra.mrb[0].mxu0 %v1622
        %v1658 = vpop.f32.mrb[0].mxu0
        %v1659 = vadd.f32 %v1619, %v1658
        %v1660 = vpop.f32.mrb[0].mxu0
        %v1661 = vpop.f32.mrb[0].mxu0
        %v1662 = vpop.f32.mrb[0].mxu0
        %1663 = vdwg.mxu0
        %1664 = vst.msk [vmem:[%s450] sm:$0xff] %vm476, %v1659
        %s1665 = sand.u32 %s236, 1
        %s1666 = scalar_lea.sflag [#allocation4], %s1665
        %s1667 = sand.u32 %s236, 1
        %s1668 = smul.addr %s1667, 8
        %s1669 = scalar_lea.vmem [#allocation11], %s1668
        %s1670 = sand.u32 %s264, 1
        %s1671 = scalar_lea.sflag [#allocation13], %s1670
        %s1672 = sand.u32 %s264, 1
        %s1673 = smul.addr %s1672, 32
        %s1674 = scalar_lea.vmem [#allocation12], %s1673
        // Predicated region
        $region73: #{tpu_custom_call.1} parent=51 // pred_check
          %p1675 = pneg %p246
        $region74: #{tpu_custom_call.1} parent=51 // pred_check_branch
          %1677 = sbr.rel (%p1675) target = $region76
        $region75: #{tpu_custom_call.1} parent=51 // pred_region
          %s1679 = ssub.s32 128, 128
          %1680 = vsyncadd %s1666, %s1679
          %s1681 = sadd.s32 %s39, %s38
          %s1682 = smul.addr %s1681, 128
          %s1683 = scalar_lea.hbm %s8, %s1682
          %s1685 = sshll.u32 %s1669, 4
          %s1686 = int_to_ptr.vmem [resolvable:$true] %s1685
          %1688 = dma.vmem_to_hbm [thread:$0]  %s1686, 128, %s1683, %s1666
        $region76: #{tpu_custom_call.1} parent=51 // pred_fallthru
          _
        // Predicated region
        $region77: #{tpu_custom_call.1} parent=51 // pred_check
          %p1689 = pneg %p274
        $region78: #{tpu_custom_call.1} parent=51 // pred_check_branch
          %1691 = sbr.rel (%p1689) target = $region80
        $region79: #{tpu_custom_call.1} parent=51 // pred_region
          %s1693 = ssub.s32 512, 512
          %1694 = vsyncadd %s1671, %s1693
          %s1695 = smul.addr %s38, 4
          %s1696 = sadd.s32 %s39, %s1695
          %s1697 = smul.addr %s1696, 128
          %s1698 = scalar_lea.hbm %s9, %s1697
          %s1699 = sshll.u32 %s1674, 4
          %s1700 = int_to_ptr.vmem [resolvable:$true] %s1699
          %1705 = dma.vmem_to_hbm [thread:$0]  %s1700, 512, %s1698, %s1671, 128, 128, 8
        $region80: #{tpu_custom_call.1} parent=51 // pred_fallthru
          _
      $region52: #{tpu_custom_call.1} parent=5 // pred_fallthru
        _
      %p1706 = scmp.le.s32.totalorder 2, %s29
      // Predicated region
      $region81: #{tpu_custom_call.1} parent=5 // pred_check
        %p1707 = pneg %p1706
      $region82: #{tpu_custom_call.1} parent=5 // pred_check_branch
        %1709 = sbr.rel (%p1707) target = $region84
      $region83: #{tpu_custom_call.1} parent=5 // pred_region
        %s1710 = ssub.s32 %s29, 2
        // Predicated region
        $region85: #{tpu_custom_call.1} parent=83 // pred_check
          %p1711 = pneg %p252
        $region86: #{tpu_custom_call.1} parent=83 // pred_check_branch
          %1713 = sbr.rel (%p1711) target = $region88
        $region87: #{tpu_custom_call.1} parent=83 // pred_region
          %s1714 = sand.u32 %s237, 1
          %s1715 = scalar_lea.sflag [#allocation4], %s1714
          %s1716 = sand.u32 %s237, 1
          %s1717 = smul.addr %s1716, 8
          %s1718 = scalar_lea.vmem [#allocation11], %s1717
          %1719 = dma.done %s1715, 128
        $region88: #{tpu_custom_call.1} parent=83 // pred_fallthru
          _
        // Predicated region
        $region89: #{tpu_custom_call.1} parent=83 // pred_check
          %p1720 = pneg %p280
        $region90: #{tpu_custom_call.1} parent=83 // pred_check_branch
          %1722 = sbr.rel (%p1720) target = $region92
        $region91: #{tpu_custom_call.1} parent=83 // pred_region
          %s1723 = sand.u32 %s265, 1
          %s1724 = scalar_lea.sflag [#allocation13], %s1723
          %s1725 = sand.u32 %s265, 1
          %s1726 = smul.addr %s1725, 32
          %s1727 = scalar_lea.vmem [#allocation12], %s1726
          %1728 = dma.done %s1724, 512
        $region92: #{tpu_custom_call.1} parent=83 // pred_fallthru
          _
      $region84: #{tpu_custom_call.1} parent=5 // pred_fallthru
        _
    $region6: #{tpu_custom_call.1} parent=1 // loop_footer
      %s33 = sadd.s32 1, %s29
    $region7: #{tpu_custom_call.1} parent=1 // loop_footer_branch
      %28 = sbr.rel target = $region3
    $region8: #{tpu_custom_call.1} parent=1 // loop_exit
      _
    %1729 = vsyncpa [#allocation3], 1
    %s1730 = scalar_lea.sflag [#allocation3], 1
    %1731 = vsyncpa %s1730, 1
    %1732 = vsyncpa [#allocation6], 1
    %s1733 = scalar_lea.sflag [#allocation6], 1
    %1734 = vsyncpa %s1733, 1
    %1735 = vsyncpa [#allocation9], 1
    %1736 = vsyncpa [#allocation4], 1
    %s1737 = scalar_lea.sflag [#allocation4], 1
    %1738 = vsyncpa %s1737, 1
    %1739 = vsyncpa [#allocation13], 1
    %s1740 = scalar_lea.sflag [#allocation13], 1
    %1741 = vsyncpa %s1740, 1

</llo_original>
